<compile_context>
chip_gen: v7x
topology: tpu7x:2x2x1
jax: 0.10.0
libtpu: 0.0.40
codegen_flags: <defaults>
</compile_context>

<pallas_src>
import functools

import numpy as np
import jax
import jax.numpy as jnp
from jax import lax
from jax.experimental import pallas as pl
from jax.experimental.pallas import tpu as pltpu

N_QUBITS = 8
N_CYCLES = 4
DIM = 2 ** N_QUBITS          # 256 amplitudes
N_BRANCHES = 3
N_LAYERS = 3                 # fused gate layers streamed per branch
LANES = 128

_HI = lax.Precision.HIGHEST


# ------------------------- elementary gates (torchquantum conventions) -------------------------
def _c(x):
    return jnp.asarray(x, jnp.complex64)


def _mat(rows):
    return jnp.stack([jnp.stack([_c(e) for e in row]) for row in rows])


def hadamard():
    return _mat([[1, 1], [1, -1]]) / jnp.sqrt(jnp.float32(2.0))


def rx(t):
    c, s = jnp.cos(t / 2), jnp.sin(t / 2)
    return _mat([[c, -1j * s], [-1j * s, c]])


def ry(t):
    c, s = jnp.cos(t / 2), jnp.sin(t / 2)
    return _mat([[c, -s], [s, c]])


def rz(t):
    return _mat([[jnp.exp(-0.5j * t), 0], [0, jnp.exp(0.5j * t)]])


def u3(t, p, l):
    c, s = jnp.cos(t / 2), jnp.sin(t / 2)
    return _mat([[c, -jnp.exp(1j * l) * s],
                 [jnp.exp(1j * p) * s, jnp.exp(1j * (p + l)) * c]])


def rxx(t):
    c, s = jnp.cos(t / 2), jnp.sin(t / 2)
    return _mat([[c, 0, 0, -1j * s],
                 [0, c, -1j * s, 0],
                 [0, -1j * s, c, 0],
                 [-1j * s, 0, 0, c]])


def ctrl(g2):
    z = jnp.zeros((2, 2), jnp.complex64)
    i2 = jnp.eye(2, dtype=jnp.complex64)
    return jnp.concatenate([jnp.concatenate([i2, z], 1),
                            jnp.concatenate([z, g2], 1)], 0)


I2 = jnp.eye(2, dtype=jnp.complex64)


def kron_all(mats):
    """Wire-0-is-MSB Kronecker chain."""
    return functools.reduce(jnp.kron, mats)


def embed(g, wires):
    """Full 256x256 unitary of gate `g` on `wires` (wire 0 = MSB). `g` factor order must
    match `wires` order (first listed wire = MSB of g's index)."""
    k = len(wires)
    psi = jnp.eye(DIM, dtype=jnp.complex64).reshape([2] * N_QUBITS + [DIM])
    gt = g.reshape([2] * (2 * k))
    psi = jnp.tensordot(gt, psi, axes=(list(range(k, 2 * k)), list(wires)), precision=_HI)
    psi = jnp.moveaxis(psi, list(range(k)), list(wires))
    return psi.reshape(DIM, DIM)


def to_kernel_gate(u):
    """Pack as [Re(U^T); Im(U^T)] so the kernel can do row-vector-state @ U^T."""
    ut = u.T
    return jnp.stack([jnp.real(ut), jnp.imag(ut)]).astype(jnp.float32)


# ------------------------- parameters (deterministic, synthetic) -------------------------
def init_params(key):
    ks = jax.random.split(key, 6)
    pi = float(np.pi)
    return {
        # 10 controlled-rotation angles per branch (crx / cry / crz)
        "cr": jax.random.uniform(ks[0], (3, 10), jnp.float32, -pi, pi),
        # 6 U3 gates x 3 angles per branch
        "u3": jax.random.uniform(ks[1], (3, 6, 3), jnp.float32, -pi, pi),
        # mlp_class: Linear(6,12) -> Tanh -> Linear(12,1)
        "w1": jax.random.uniform(ks[2], (6, 12), jnp.float32, -1.0, 1.0) / np.sqrt(6.0),
        "b1": jax.random.uniform(ks[3], (12,), jnp.float32, -1.0, 1.0) / np.sqrt(6.0),
        "w2": jax.random.uniform(ks[4], (12, 1), jnp.float32, -1.0, 1.0) / np.sqrt(12.0),
        "b2": jax.random.uniform(ks[5], (1,), jnp.float32, -1.0, 1.0) / np.sqrt(12.0),
    }


# ------------------------- host-side circuit construction -------------------------
def build_encoded_state(theta, phi):
    """Apply the 68-gate encoder to |0..0> on the host via 13 layer mat-vecs.
    Returns (2, 256) f32: [Re(psi), Im(psi)] as a row-vector state."""
    h = hadamard()
    rz_g = rz(2.0 * phi)
    rxx_g = rxx(2.0 * theta)

    layers = [kron_all([h] * 8)]
    rz_layer = kron_all([rz_g] * 8)                        # RZ on all 8 wires
    rxx_even = kron_all([rxx_g] * 4)                       # (0,1)(2,3)(4,5)(6,7)
    rxx_odd = kron_all([I2, rxx_g, rxx_g, rxx_g, I2])      # (1,2)(3,4)(5,6)
    for _ in range(N_CYCLES):
        layers += [rz_layer, rxx_even, rxx_odd]

    psi = jnp.zeros((DIM,), jnp.complex64).at[0].set(1.0)
    for lyr in layers:
        psi = jnp.matmul(lyr, psi, precision=_HI)          # column-vector convention
    return jnp.stack([jnp.real(psi), jnp.imag(psi)]).astype(jnp.float32)   # (2, 256)


def build_branch_layers(params):
    """Returns (3, 2*N_LAYERS, 256, 256) f32: per branch, 3 fused layer unitaries packed
    as [Re(U^T), Im(U^T)] pairs.  Fusion uses only small (4x4 / 16x16) products."""
    rot_fns = [rx, ry, rz]                   # branch 0: CRX, branch 1: CRY, branch 2: CRZ
    branches = []
    for b in range(N_BRANCHES):
        rot = rot_fns[b]
        cr = [ctrl(rot(params["cr"][b, i])) for i in range(10)]
        u3g = []
        for i in range(6):
            a = params["u3"][b, i]
            u3g.append(u3(a[0], a[1], a[2]))

        # Layer A: CR on (0,1)(2,3)(4,5)(6,7)
        layer_a = kron_all([cr[0], cr[1], cr[2], cr[3]])
        # Layer B: CR on (1,2)(3,4)(5,6) and U3 on wire 7 (disjoint wires -> one layer)
        layer_b = kron_all([I2, cr[4], cr[5], cr[6], u3g[3]])
        # Layer C on wires (1,3,5,7), kron factor order = (1,3,5,7):
        #   U3(1),U3(3),U3(5)  ->  CR(1,3) & CR(5,7)  ->  CR(3,5)  ->  U3(3),U3(7)
        u3_first = kron_all([u3g[0], u3g[1], u3g[2], I2])
        cr_ab = jnp.kron(cr[7], cr[8])
        cr_mid = kron_all([I2, cr[9], I2])
        u3_last = kron_all([I2, u3g[4], I2, u3g[5]])
        c16 = jnp.matmul(
            u3_last,
            jnp.matmul(cr_mid, jnp.matmul(cr_ab, u3_first, precision=_HI), precision=_HI),
            precision=_HI)
        layer_c = embed(c16, [1, 3, 5, 7])

        layers = [layer_a, layer_b, layer_c]
        assert len(layers) == N_LAYERS
        packed = jnp.stack([to_kernel_gate(u) for u in layers])      # (3, 2, 256, 256)
        branches.append(packed.reshape(2 * N_LAYERS, DIM, DIM))

    return jnp.stack(branches)                                       # (3, 6, 256, 256)


def make_zsign():
    """Pauli-Z eigenvalue masks for wires 3 and 7 (wire 0 = MSB of the basis index)."""
    idx = np.arange(DIM)
    z3 = 1.0 - 2.0 * ((idx >> (N_QUBITS - 1 - 3)) & 1)
    z7 = 1.0 - 2.0 * ((idx >> (N_QUBITS - 1 - 7)) & 1)
    return jnp.asarray(np.stack([z3, z7]), jnp.float32)              # (2, 256)


# ------------------------- Pallas kernel: one grid step = one full branch -------------------------
def circuit_kernel(state_ref, layers_ref, zsign_ref, out_ref):
    # Encoded state carried as SSA values: Re / Im in row 0 of (8, 256) tiles.
    r = lax.broadcasted_iota(jnp.int32, (8, DIM), 0)
    s_re = jnp.where(r == 0, state_ref[0:1, :], 0.0).astype(jnp.float32)
    s_im = jnp.where(r == 0, state_ref[1:2, :], 0.0).astype(jnp.float32)

    # apply the fused branch layers (state is a row vector, gates stored as U^T)
    for l in range(N_LAYERS):
        gr = layers_ref[0, 2 * l]          # Re(U^T), (256, 256)
        gi = layers_ref[0, 2 * l + 1]      # Im(U^T)
        re = (jnp.dot(s_re, gr, preferred_element_type=jnp.float32)
              - jnp.dot(s_im, gi, preferred_element_type=jnp.float32))
        im = (jnp.dot(s_re, gi, preferred_element_type=jnp.float32)
              + jnp.dot(s_im, gr, preferred_element_type=jnp.float32))
        s_re, s_im = re, im

    probs = s_re[0:1, :] * s_re[0:1, :] + s_im[0:1, :] * s_im[0:1, :]          # (1, 256)
    ev = jnp.sum(probs * zsign_ref[...], axis=-1, keepdims=True)               # (2, 1): <Z3>, <Z7>
    out_ref[0] = jnp.broadcast_to(ev, (2, LANES))


def run_circuit(enc_state, layers, zsign):
    return pl.pallas_call(
        circuit_kernel,
        out_shape=jax.ShapeDtypeStruct((N_BRANCHES, 2, LANES), jnp.float32),
        grid_spec=pltpu.PrefetchScalarGridSpec(
            num_scalar_prefetch=0,
            grid=(N_BRANCHES,),
            in_specs=[
                pl.BlockSpec((2, DIM), lambda b: (0, 0)),                     # encoded state (shared)
                pl.BlockSpec((1, 2 * N_LAYERS, DIM, DIM), lambda b: (b, 0, 0, 0)),
                pl.BlockSpec((2, DIM), lambda b: (0, 0)),                     # Z-sign masks (shared)
            ],
            out_specs=pl.BlockSpec((1, 2, LANES), lambda b: (b, 0, 0)),
        ),
        compiler_params=pltpu.CompilerParams(
            dimension_semantics=("parallel",)),   # branches independent -> megacore on v7x
    )(enc_state, layers, zsign)


# ------------------------- production forward -------------------------
@jax.jit
def qcnn_forward(theta, phi, params):
    enc_state = build_encoded_state(theta, phi)        # (2, 256) f32, ~2 KB
    layers = build_branch_layers(params)               # (3, 6, 256, 256) f32, ~4.5 MB
    zsign = make_zsign()
    expvals = run_circuit(enc_state, layers, zsign)    # (3, 2, 128), value replicated on lanes
    feats = expvals[:, :, 0].reshape(1, 6)             # == torch.cat((x, y, z), 1)
    # MLP head (6 -> 12 -> tanh -> 1 -> sigmoid) in plain JAX: ~100 FLOPs, not worth a kernel.
    h = jnp.tanh(feats @ params["w1"] + params["b1"])
    return jax.nn.sigmoid(h @ params["w2"] + params["b2"])     # (1, 1)


# ------------------------- independent pure-JAX reference (kept OUT of the jitted forward) -------------------------
def _apply_gate(psi, g, wires):
    k = len(wires)
    gt = g.reshape([2] * (2 * k))
    psi = jnp.tensordot(gt, psi, axes=(list(range(k, 2 * k)), list(wires)), precision=_HI)
    return jnp.moveaxis(psi, list(range(k)), list(wires))


def _qcnn_reference(theta, phi, params):
    psi = jnp.zeros([2] * N_QUBITS, jnp.complex64).at[(0,) * N_QUBITS].set(1.0)
    h = hadamard()
    rz_g = rz(2.0 * phi)
    rxx_g = rxx(2.0 * theta)
    for q in range(N_QUBITS):
        psi = _apply_gate(psi, h, [q])
    for _ in range(N_CYCLES):
        for q in range(N_QUBITS):
            psi = _apply_gate(psi, rz_g, [q])
        for num in range(N_QUBITS):
            if num % 2 == 1 and num - 1 >= 0:
                psi = _apply_gate(psi, rxx_g, [num - 1, num])
        for num in range(N_QUBITS):
            if num % 2 == 0 and num - 1 >= 0:
                psi = _apply_gate(psi, rxx_g, [num - 1, num])

    rot_fns = [rx, ry, rz]
    cr_pairs_a = [(0, 1), (2, 3), (4, 5), (6, 7), (1, 2), (3, 4), (5, 6)]
    u3_wires_a = [1, 3, 5, 7]
    cr_pairs_b = [(1, 3), (5, 7), (3, 5)]
    u3_wires_b = [3, 7]
    zsign = make_zsign()

    feats = []
    for b in range(N_BRANCHES):
        rot = rot_fns[b]
        p = psi
        for i, (cw, tw) in enumerate(cr_pairs_a):
            p = _apply_gate(p, ctrl(rot(params["cr"][b, i])), [cw, tw])
        for i, w in enumerate(u3_wires_a):
            a = params["u3"][b, i]
            p = _apply_gate(p, u3(a[0], a[1], a[2]), [w])
        for i, (cw, tw) in enumerate(cr_pairs_b):
            p = _apply_gate(p, ctrl(rot(params["cr"][b, 7 + i])), [cw, tw])
        for i, w in enumerate(u3_wires_b):
            a = params["u3"][b, 4 + i]
            p = _apply_gate(p, u3(a[0], a[1], a[2]), [w])
        amp = p.reshape(-1)
        probs = (jnp.abs(amp) ** 2).astype(jnp.float32)
        feats += [jnp.sum(probs * zsign[0]), jnp.sum(probs * zsign[1])]

    f = jnp.stack(feats).reshape(1, 6)
    h1 = jnp.tanh(f @ params["w1"] + params["b1"])
    return jax.nn.sigmoid(h1 @ params["w2"] + params["b2"])


qcnn_reference = jax.jit(_qcnn_reference)


if __name__ == "__main__":
    key = jax.random.PRNGKey(0)
    k_theta, k_phi, k_params = jax.random.split(key, 3)
    theta = jax.random.uniform(k_theta, (), jnp.float32, 0.0, float(np.pi / 2))
    phi = jax.random.uniform(k_phi, (), jnp.float32, 0.0, float(np.pi / 2))
    params = init_params(k_params)

    result = jax.block_until_ready(qcnn_forward(theta, phi, params))
    assert result.shape == (1, 1)

    ref = jax.block_until_ready(qcnn_reference(theta, phi, params))
    np.testing.assert_allclose(np.asarray(result), np.asarray(ref), rtol=1e-3, atol=1e-4)
    print("KERNEL_OK")
</pallas_src>

<mosaic_0001>
module attributes {stable_mosaic.version = 11 : i64} {
  func.func @circuit_kernel(%arg0: i32, %arg1: memref<2x256xf32, #tpu.memory_space<vmem>>, %arg2: memref<1x6x256x256xf32, #tpu.memory_space<vmem>>, %arg3: memref<2x256xf32, #tpu.memory_space<vmem>>, %arg4: memref<1x2x128xf32, #tpu.memory_space<vmem>>) attributes {dimension_semantics = [#tpu.dimension_semantics<parallel>], iteration_bounds = array<i64: 3>, scalar_prefetch = 0 : i64, scratch_operands = 0 : i64, tpu.core_type = #tpu.core_type<tc>, window_params = [{pipeline_mode = #tpu.pipeline_mode<synchronous>, transform_indices = @transform_0, window_bounds = array<i64: 2, 256>}, {transform_indices = @transform_1, window_bounds = array<i64: 1, 6, 256, 256>}, {pipeline_mode = #tpu.pipeline_mode<synchronous>, transform_indices = @transform_2, window_bounds = array<i64: 2, 256>}, {transform_indices = @transform_3, window_bounds = array<i64: 1, 2, 128>}]} {
    %0 = tpu.iota {dimensions = array<i32: 0>} : vector<8x256xi32>
    %c0_i32 = arith.constant 0 : i32
    %1 = vector.broadcast %c0_i32 : i32 to vector<8x256xi32>
    %2 = arith.cmpi eq, %0, %1 : vector<8x256xi32>
    %c0 = arith.constant 0 : index
    %c0_0 = arith.constant 0 : index
    %3 = vector.load %arg1[%c0, %c0_0] : memref<2x256xf32, #tpu.memory_space<vmem>>, vector<1x256xf32>
    %cst = arith.constant 0.000000e+00 : f32
    %4 = vector.shape_cast %3 : vector<1x256xf32> to vector<1x256xf32>
    %5 = vector.broadcast %4 : vector<1x256xf32> to vector<8x256xf32>
    %6 = vector.broadcast %cst : f32 to vector<8x256xf32>
    %7 = arith.select %2, %5, %6 : vector<8x256xi1>, vector<8x256xf32>
    %c0_i32_1 = arith.constant 0 : i32
    %8 = vector.broadcast %c0_i32_1 : i32 to vector<8x256xi32>
    %9 = arith.cmpi eq, %0, %8 : vector<8x256xi32>
    %c1 = arith.constant 1 : index
    %c0_2 = arith.constant 0 : index
    %10 = vector.load %arg1[%c1, %c0_2] : memref<2x256xf32, #tpu.memory_space<vmem>>, vector<1x256xf32>
    %cst_3 = arith.constant 0.000000e+00 : f32
    %11 = vector.shape_cast %10 : vector<1x256xf32> to vector<1x256xf32>
    %12 = vector.broadcast %11 : vector<1x256xf32> to vector<8x256xf32>
    %13 = vector.broadcast %cst_3 : f32 to vector<8x256xf32>
    %14 = arith.select %9, %12, %13 : vector<8x256xi1>, vector<8x256xf32>
    %c0_4 = arith.constant 0 : index
    %c0_5 = arith.constant 0 : index
    %c0_6 = arith.constant 0 : index
    %c0_7 = arith.constant 0 : index
    %15 = vector.load %arg2[%c0_4, %c0_5, %c0_6, %c0_7] : memref<1x6x256x256xf32, #tpu.memory_space<vmem>>, vector<1x1x256x256xf32>
    %16 = vector.shape_cast %15 : vector<1x1x256x256xf32> to vector<256x256xf32>
    %c0_8 = arith.constant 0 : index
    %c1_9 = arith.constant 1 : index
    %c0_10 = arith.constant 0 : index
    %c0_11 = arith.constant 0 : index
    %17 = vector.load %arg2[%c0_8, %c1_9, %c0_10, %c0_11] : memref<1x6x256x256xf32, #tpu.memory_space<vmem>>, vector<1x1x256x256xf32>
    %18 = vector.shape_cast %17 : vector<1x1x256x256xf32> to vector<256x256xf32>
    %cst_12 = arith.constant dense<0.000000e+00> : vector<8x256xf32>
    %19 = tpu.matmul %7, %16, %cst_12 {dimension_numbers = #tpu.dot_dimension_numbers<[1], [0], [0], [1], [0, 0, 1, 1], [], []>} : vector<8x256xf32>, vector<256x256xf32>, vector<8x256xf32> -> vector<8x256xf32>
    %cst_13 = arith.constant dense<0.000000e+00> : vector<8x256xf32>
    %20 = tpu.matmul %14, %18, %cst_13 {dimension_numbers = #tpu.dot_dimension_numbers<[1], [0], [0], [1], [0, 0, 1, 1], [], []>} : vector<8x256xf32>, vector<256x256xf32>, vector<8x256xf32> -> vector<8x256xf32>
    %21 = arith.subf %19, %20 : vector<8x256xf32>
    %cst_14 = arith.constant dense<0.000000e+00> : vector<8x256xf32>
    %22 = tpu.matmul %7, %18, %cst_14 {dimension_numbers = #tpu.dot_dimension_numbers<[1], [0], [0], [1], [0, 0, 1, 1], [], []>} : vector<8x256xf32>, vector<256x256xf32>, vector<8x256xf32> -> vector<8x256xf32>
    %cst_15 = arith.constant dense<0.000000e+00> : vector<8x256xf32>
    %23 = tpu.matmul %14, %16, %cst_15 {dimension_numbers = #tpu.dot_dimension_numbers<[1], [0], [0], [1], [0, 0, 1, 1], [], []>} : vector<8x256xf32>, vector<256x256xf32>, vector<8x256xf32> -> vector<8x256xf32>
    %24 = arith.addf %22, %23 : vector<8x256xf32>
    %c0_16 = arith.constant 0 : index
    %c2 = arith.constant 2 : index
    %c0_17 = arith.constant 0 : index
    %c0_18 = arith.constant 0 : index
    %25 = vector.load %arg2[%c0_16, %c2, %c0_17, %c0_18] : memref<1x6x256x256xf32, #tpu.memory_space<vmem>>, vector<1x1x256x256xf32>
    %26 = vector.shape_cast %25 : vector<1x1x256x256xf32> to vector<256x256xf32>
    %c0_19 = arith.constant 0 : index
    %c3 = arith.constant 3 : index
    %c0_20 = arith.constant 0 : index
    %c0_21 = arith.constant 0 : index
    %27 = vector.load %arg2[%c0_19, %c3, %c0_20, %c0_21] : memref<1x6x256x256xf32, #tpu.memory_space<vmem>>, vector<1x1x256x256xf32>
    %28 = vector.shape_cast %27 : vector<1x1x256x256xf32> to vector<256x256xf32>
    %cst_22 = arith.constant dense<0.000000e+00> : vector<8x256xf32>
    %29 = tpu.matmul %21, %26, %cst_22 {dimension_numbers = #tpu.dot_dimension_numbers<[1], [0], [0], [1], [0, 0, 1, 1], [], []>} : vector<8x256xf32>, vector<256x256xf32>, vector<8x256xf32> -> vector<8x256xf32>
    %cst_23 = arith.constant dense<0.000000e+00> : vector<8x256xf32>
    %30 = tpu.matmul %24, %28, %cst_23 {dimension_numbers = #tpu.dot_dimension_numbers<[1], [0], [0], [1], [0, 0, 1, 1], [], []>} : vector<8x256xf32>, vector<256x256xf32>, vector<8x256xf32> -> vector<8x256xf32>
    %31 = arith.subf %29, %30 : vector<8x256xf32>
    %cst_24 = arith.constant dense<0.000000e+00> : vector<8x256xf32>
    %32 = tpu.matmul %21, %28, %cst_24 {dimension_numbers = #tpu.dot_dimension_numbers<[1], [0], [0], [1], [0, 0, 1, 1], [], []>} : vector<8x256xf32>, vector<256x256xf32>, vector<8x256xf32> -> vector<8x256xf32>
    %cst_25 = arith.constant dense<0.000000e+00> : vector<8x256xf32>
    %33 = tpu.matmul %24, %26, %cst_25 {dimension_numbers = #tpu.dot_dimension_numbers<[1], [0], [0], [1], [0, 0, 1, 1], [], []>} : vector<8x256xf32>, vector<256x256xf32>, vector<8x256xf32> -> vector<8x256xf32>
    %34 = arith.addf %32, %33 : vector<8x256xf32>
    %c0_26 = arith.constant 0 : index
    %c4 = arith.constant 4 : index
    %c0_27 = arith.constant 0 : index
    %c0_28 = arith.constant 0 : index
    %35 = vector.load %arg2[%c0_26, %c4, %c0_27, %c0_28] : memref<1x6x256x256xf32, #tpu.memory_space<vmem>>, vector<1x1x256x256xf32>
    %36 = vector.shape_cast %35 : vector<1x1x256x256xf32> to vector<256x256xf32>
    %c0_29 = arith.constant 0 : index
    %c5 = arith.constant 5 : index
    %c0_30 = arith.constant 0 : index
    %c0_31 = arith.constant 0 : index
    %37 = vector.load %arg2[%c0_29, %c5, %c0_30, %c0_31] : memref<1x6x256x256xf32, #tpu.memory_space<vmem>>, vector<1x1x256x256xf32>
    %38 = vector.shape_cast %37 : vector<1x1x256x256xf32> to vector<256x256xf32>
    %cst_32 = arith.constant dense<0.000000e+00> : vector<8x256xf32>
    %39 = tpu.matmul %31, %36, %cst_32 {dimension_numbers = #tpu.dot_dimension_numbers<[1], [0], [0], [1], [0, 0, 1, 1], [], []>} : vector<8x256xf32>, vector<256x256xf32>, vector<8x256xf32> -> vector<8x256xf32>
    %cst_33 = arith.constant dense<0.000000e+00> : vector<8x256xf32>
    %40 = tpu.matmul %34, %38, %cst_33 {dimension_numbers = #tpu.dot_dimension_numbers<[1], [0], [0], [1], [0, 0, 1, 1], [], []>} : vector<8x256xf32>, vector<256x256xf32>, vector<8x256xf32> -> vector<8x256xf32>
    %41 = arith.subf %39, %40 : vector<8x256xf32>
    %cst_34 = arith.constant dense<0.000000e+00> : vector<8x256xf32>
    %42 = tpu.matmul %31, %38, %cst_34 {dimension_numbers = #tpu.dot_dimension_numbers<[1], [0], [0], [1], [0, 0, 1, 1], [], []>} : vector<8x256xf32>, vector<256x256xf32>, vector<8x256xf32> -> vector<8x256xf32>
    %cst_35 = arith.constant dense<0.000000e+00> : vector<8x256xf32>
    %43 = tpu.matmul %34, %36, %cst_35 {dimension_numbers = #tpu.dot_dimension_numbers<[1], [0], [0], [1], [0, 0, 1, 1], [], []>} : vector<8x256xf32>, vector<256x256xf32>, vector<8x256xf32> -> vector<8x256xf32>
    %44 = arith.addf %42, %43 : vector<8x256xf32>
    %45 = vector.extract_strided_slice %41 {offsets = [0, 0], sizes = [1, 256], strides = [1, 1]} : vector<8x256xf32> to vector<1x256xf32>
    %46 = vector.extract_strided_slice %41 {offsets = [0, 0], sizes = [1, 256], strides = [1, 1]} : vector<8x256xf32> to vector<1x256xf32>
    %47 = arith.mulf %45, %46 : vector<1x256xf32>
    %48 = vector.extract_strided_slice %44 {offsets = [0, 0], sizes = [1, 256], strides = [1, 1]} : vector<8x256xf32> to vector<1x256xf32>
    %49 = vector.extract_strided_slice %44 {offsets = [0, 0], sizes = [1, 256], strides = [1, 1]} : vector<8x256xf32> to vector<1x256xf32>
    %50 = arith.mulf %48, %49 : vector<1x256xf32>
    %51 = arith.addf %47, %50 : vector<1x256xf32>
    %c0_36 = arith.constant 0 : index
    %c0_37 = arith.constant 0 : index
    %52 = vector.load %arg3[%c0_36, %c0_37] : memref<2x256xf32, #tpu.memory_space<vmem>>, vector<2x256xf32>
    %53 = vector.broadcast %51 : vector<1x256xf32> to vector<2x256xf32>
    %54 = arith.mulf %53, %52 : vector<2x256xf32>
    %cst_38 = arith.constant dense<0.000000e+00> : vector<2xf32>
    %55 = vector.multi_reduction <add>, %54, %cst_38 [1] : vector<2x256xf32> to vector<2xf32>
    %56 = vector.shape_cast %55 : vector<2xf32> to vector<2x1xf32>
    %57 = vector.shape_cast %56 : vector<2x1xf32> to vector<2x1xf32>
    %58 = vector.broadcast %57 : vector<2x1xf32> to vector<2x128xf32>
    %c0_39 = arith.constant 0 : index
    %c0_40 = arith.constant 0 : index
    %c0_41 = arith.constant 0 : index
    %59 = vector.load %arg4[%c0_39, %c0_40, %c0_41] : memref<1x2x128xf32, #tpu.memory_space<vmem>>, vector<1x2x128xf32>
    %60 = vector.shape_cast %59 : vector<1x2x128xf32> to vector<2x128xf32>
    %61 = vector.shape_cast %58 : vector<2x128xf32> to vector<1x2x128xf32>
    tpu.vector_store %arg4[%c0_39, %c0_40, %c0_41], %61 {strides = array<i32>} : memref<1x2x128xf32, #tpu.memory_space<vmem>>, vector<1x2x128xf32>,
    return
  }
  func.func @transform_0(%arg0: i32) -> (i32, i32) {
    %c0_i32 = arith.constant 0 : i32
    %c0_i32_0 = arith.constant 0 : i32
    %c0_i32_1 = arith.constant 0 : i32
    return %c0_i32, %c0_i32_0 : i32, i32
  }
  func.func @transform_1(%arg0: i32) -> (i32, i32, i32, i32) {
    %c0_i32 = arith.constant 0 : i32
    %c0_i32_0 = arith.constant 0 : i32
    %c0_i32_1 = arith.constant 0 : i32
    %c0_i32_2 = arith.constant 0 : i32
    return %arg0, %c0_i32, %c0_i32_0, %c0_i32_1 : i32, i32, i32, i32
  }
  func.func @transform_2(%arg0: i32) -> (i32, i32) {
    %c0_i32 = arith.constant 0 : i32
    %c0_i32_0 = arith.constant 0 : i32
    %c0_i32_1 = arith.constant 0 : i32
    return %c0_i32, %c0_i32_0 : i32, i32
  }
  func.func @transform_3(%arg0: i32) -> (i32, i32, i32) {
    %c0_i32 = arith.constant 0 : i32
    %c0_i32_0 = arith.constant 0 : i32
    %c0_i32_1 = arith.constant 0 : i32
    return %arg0, %c0_i32, %c0_i32_0 : i32, i32, i32
  }
}

</mosaic_0001>

<llo_original>
// kernel: qcnn_forward.1
$region0: #{qcnn_forward.1}
  #allocation0 [shape = 'u32[]', space=smem, size = 0x4, offset = 0x4, fixed_abs, tag = 'smem constant byte address 0x4 - core index']
  #allocation1 [shape = 'u32[144,128]{1,0:T(1,128)}', space=vmem, size = 0x12000, scoped, tag = 'internal scratch']
  %s0 = inlined_call_operand.vmem [shape: f32[2,256], index: 0, kind: input, shape index: {}]
  %s1 = inlined_call_operand.vmem [shape: f32[3,6,256,256], index: 1, kind: input, shape index: {}]
  %s2 = inlined_call_operand.vmem [shape: f32[2,256], index: 2, kind: input, shape index: {}]
  %s3 = inlined_call_operand.vmem [shape: f32[3,2,128], index: 3, kind: output, shape index: {}]
  %s4 = sld [smem:[#allocation0]]
  $region45: #{qcnn_forward.1} parent=0
    _
  %s6 = ssub.s32 1, %s4
  %s7 = scalar_select 0, %s6, %s4
  loop: start=0, step=1, limit=5
  $region2: #{qcnn_forward.1} parent=0 // loop_pre_header
    _
  $region3: #{qcnn_forward.1} parent=0 // loop_header
    %s9 = sphi 0, %s13
    %p10 = scmp.ge.s32.totalorder %s9, 5
    %s17 = sphi 0, %s17
    %s19 = sphi 0, %s17
    %s20 = sphi 0, %s19
    %s34 = sphi 0, %s20
    %s40 = sphi 0, %s42
    %s43 = sphi 0, %s40
    %s44 = sphi 0, %s43
    %s60 = sphi 0, %s44
    %s64 = sphi 0, %s64
    %s66 = sphi 0, %s64
    %s67 = sphi 0, %s66
    %s81 = sphi 0, %s67
    %s87 = sphi 0, %s89
    %s90 = sphi 0, %s87
    %s91 = sphi 0, %s90
    %s107 = sphi 0, %s91
  $region4: #{qcnn_forward.1} parent=0 // loop_header_branch
    %12 = sbr.rel (%p10) target = $region8
  $region5: #{qcnn_forward.1} parent=0 // loop_body
    %s14 = ssub.s32 %s9, 1
    %s15 = ssub.s32 %s9, 2
    %s16 = sadd.s32 %s9, 1
    %s18 = sadd.s32 %s17, 1
    %p21 = scmp.eq.s32.totalorder %s9, 2
    %p22 = scmp.ne.s32.totalorder %s17, %s19
    %p23 = scmp.eq.s32.totalorder %s9, 0
    %p24 = por %p22, %p23
    %p25 = scmp.ne.s32.totalorder %s17, %s19
    %p26 = scmp.eq.s32.totalorder %s14, 2
    %p27 = por %p25, %p26
    %p28 = scmp.ne.s32.totalorder %s19, %s20
    %p29 = scmp.eq.s32.totalorder %s14, 0
    %p30 = por %p28, %p29
    %p31 = scmp.ne.s32.totalorder %s19, %s20
    %p32 = scmp.eq.s32.totalorder %s15, 2
    %p33 = por %p31, %p32
    %p35 = scmp.ne.s32.totalorder %s20, %s34
    %p36 = scmp.eq.s32.totalorder %s15, 0
    %p37 = por %p35, %p36
    %s38 = ssub.s32 %s9, %s16
    %p39 = scmp.eq.s32.totalorder %s38, 0
    %s41 = sadd.s32 %s40, 1
    %s42 = scalar_select %p39, %s40, %s41
    %p45 = pneg %p39
    %p46 = scmp.eq.s32.totalorder %s9, 2
    %p47 = por %p45, %p46
    %p48 = scmp.ne.s32.totalorder %s40, %s43
    %p49 = scmp.eq.s32.totalorder %s9, 0
    %p50 = por %p48, %p49
    %p51 = scmp.ne.s32.totalorder %s40, %s43
    %p52 = scmp.eq.s32.totalorder %s14, 2
    %p53 = por %p51, %p52
    %p54 = scmp.ne.s32.totalorder %s43, %s44
    %p55 = scmp.eq.s32.totalorder %s14, 0
    %p56 = por %p54, %p55
    %p57 = scmp.ne.s32.totalorder %s43, %s44
    %p58 = scmp.eq.s32.totalorder %s15, 2
    %p59 = por %p57, %p58
    %p61 = scmp.ne.s32.totalorder %s44, %s60
    %p62 = scmp.eq.s32.totalorder %s15, 0
    %p63 = por %p61, %p62
    %s65 = sadd.s32 %s64, 1
    %p68 = scmp.eq.s32.totalorder %s9, 2
    %p69 = scmp.ne.s32.totalorder %s64, %s66
    %p70 = scmp.eq.s32.totalorder %s9, 0
    %p71 = por %p69, %p70
    %p72 = scmp.ne.s32.totalorder %s64, %s66
    %p73 = scmp.eq.s32.totalorder %s14, 2
    %p74 = por %p72, %p73
    %p75 = scmp.ne.s32.totalorder %s66, %s67
    %p76 = scmp.eq.s32.totalorder %s14, 0
    %p77 = por %p75, %p76
    %p78 = scmp.ne.s32.totalorder %s66, %s67
    %p79 = scmp.eq.s32.totalorder %s15, 2
    %p80 = por %p78, %p79
    %p82 = scmp.ne.s32.totalorder %s67, %s81
    %p83 = scmp.eq.s32.totalorder %s15, 0
    %p84 = por %p82, %p83
    %s85 = ssub.s32 %s9, %s16
    %p86 = scmp.eq.s32.totalorder %s85, 0
    %s88 = sadd.s32 %s87, 1
    %s89 = scalar_select %p86, %s87, %s88
    %p92 = pneg %p86
    %p93 = scmp.eq.s32.totalorder %s9, 2
    %p94 = por %p92, %p93
    %p95 = scmp.ne.s32.totalorder %s87, %s90
    %p96 = scmp.eq.s32.totalorder %s9, 0
    %p97 = por %p95, %p96
    %p98 = scmp.ne.s32.totalorder %s87, %s90
    %p99 = scmp.eq.s32.totalorder %s14, 2
    %p100 = por %p98, %p99
    %p101 = scmp.ne.s32.totalorder %s90, %s91
    %p102 = scmp.eq.s32.totalorder %s14, 0
    %p103 = por %p101, %p102
    %p104 = scmp.ne.s32.totalorder %s90, %s91
    %p105 = scmp.eq.s32.totalorder %s15, 2
    %p106 = por %p104, %p105
    %p108 = scmp.ne.s32.totalorder %s91, %s107
    %p109 = scmp.eq.s32.totalorder %s15, 0
    %p110 = por %p108, %p109
    %p111 = scmp.le.s32.totalorder 1, %s9
    %p112 = scmp.lt.s32.totalorder %s9, 4
    %p113 = pnand %p111, %p112
    %p114 = pneg %p113
    // Predicated region
    $region9: #{qcnn_forward.1} parent=5 // pred_check
      _
    $region10: #{qcnn_forward.1} parent=5 // pred_check_branch
      %116 = sbr.rel (%p113) target = $region12
    $region11: #{qcnn_forward.1} parent=5 // pred_region
      %s117 = ssub.s32 %s9, 1
      // Predicated region
      $region13: #{qcnn_forward.1} parent=11 // pred_check
        %p118 = pneg %p30
      $region14: #{qcnn_forward.1} parent=11 // pred_check_branch
        %120 = sbr.rel (%p118) target = $region16
      $region15: #{qcnn_forward.1} parent=11 // pred_region
        _
      $region16: #{qcnn_forward.1} parent=11 // pred_fallthru
        _
      // Predicated region
      $region17: #{qcnn_forward.1} parent=11 // pred_check
        %p121 = pneg %p77
      $region18: #{qcnn_forward.1} parent=11 // pred_check_branch
        %123 = sbr.rel (%p121) target = $region20
      $region19: #{qcnn_forward.1} parent=11 // pred_region
        _
      $region20: #{qcnn_forward.1} parent=11 // pred_fallthru
        _
    $region12: #{qcnn_forward.1} parent=5 // pred_fallthru
      _
    %p124 = scmp.lt.s32.totalorder %s9, 3
    // Predicated region
    $region21: #{qcnn_forward.1} parent=5 // pred_check
      %p125 = pneg %p124
    $region22: #{qcnn_forward.1} parent=5 // pred_check_branch
      %127 = sbr.rel (%p125) target = $region24
    $region23: #{qcnn_forward.1} parent=5 // pred_region
      // Predicated region
      $region25: #{qcnn_forward.1} parent=23 // pred_check
        %p128 = pneg %p50
      $region26: #{qcnn_forward.1} parent=23 // pred_check_branch
        %130 = sbr.rel (%p128) target = $region28
      $region27: #{qcnn_forward.1} parent=23 // pred_region
        %p131 = scmp.lt.s32.totalorder %s9, 2
        %s132 = scalar_select %p131, %s9, 2
        %s133 = smul.addr %s132, 384
        %s134 = smul.addr %s133, 8
        %s135 = scalar_lea.vmem %s1, %s134
      $region28: #{qcnn_forward.1} parent=23 // pred_fallthru
        _
    $region24: #{qcnn_forward.1} parent=5 // pred_fallthru
      _
    %p136 = scmp.le.s32.totalorder 1, %s9
    %p137 = scmp.lt.s32.totalorder %s9, 4
    %p138 = pnand %p136, %p137
    %p139 = pneg %p138
    // Predicated region
    $region29: #{qcnn_forward.1} parent=5 // pred_check
      _
    $region30: #{qcnn_forward.1} parent=5 // pred_check_branch
      %141 = sbr.rel (%p138) target = $region32
    $region31: #{qcnn_forward.1} parent=5 // pred_region
      %s142 = ssub.s32 %s9, 1
      %p143 = pneg %p30
      %p144 = pneg %p27
      %p145 = scmp.lt.s32.totalorder %s14, 2
      %s146 = scalar_select %p145, %s14, 2
      %s147 = smul.addr %s146, 384
      %s148 = smul.addr %s147, 8
      %s149 = scalar_lea.vmem %s1, %s148
      %p150 = pneg %p56
      %p151 = pneg %p53
      %p152 = pneg %p77
      %p153 = pneg %p74
      %p154 = pneg %p103
      %p155 = pneg %p100
      %p156 = scmp.lt.s32.totalorder %s14, 2
      %s157 = scalar_select %p156, %s14, 2
      %s158 = smul.addr %s157, 2
      %s159 = scalar_lea.vmem %s3, %s158
      %p160 = scmp.lt.s32.totalorder %s14, 2
      %s161 = scalar_select %p160, %s14, 2
      %s162 = smul.addr %s161, 384
      %s163 = smul.addr %s162, 8
      %s164 = scalar_lea.vmem %s1, %s163
      %p165 = scmp.lt.s32.totalorder %s14, 2
      %s166 = scalar_select %p165, %s14, 2
      %s167 = smul.addr %s166, 2
      %s168 = scalar_lea.vmem %s3, %s167
      %v169 = vlaneseq
      %v170 = vshrl.u32 %v169, 7
      %vm171 = vcmp.eq.s32.totalorder %v170, 0
      %v172 = vld [vmem:[%s0] ss:$2 sm:$0x3]
      %v174 = vlaneseq
      %v175 = vshrl.u32 %v174, 7
      %v176 = vsub.s32 0, %v175
      %v177 = vrot.slane %v172, %v176
      %v178 = vlaneseq
      %v179 = vshrl.u32 %v178, 7
      %v180 = vsub.s32 1, %v179
      %v181 = vrot.slane %v172, %v180
      %v184 = vsel %vm171, %v177, 0.0
      %v185 = vsel %vm171, %v181, 0.0
      %s186 = scalar_lea.vmem %s0, 1
      %v187 = vld [vmem:[%s186] ss:$2 sm:$0x3]
      %v189 = vlaneseq
      %v190 = vshrl.u32 %v189, 7
      %v191 = vsub.s32 0, %v190
      %v192 = vrot.slane %v187, %v191
      %v193 = vlaneseq
      %v194 = vshrl.u32 %v193, 7
      %v195 = vsub.s32 1, %v194
      %v196 = vrot.slane %v187, %v195
      %v199 = vsel %vm171, %v192, 0.0
      %v200 = vsel %vm171, %v196, 0.0
      %v201 = vld [vmem:[%s164] sm:$0xff]
      %v202 = vld [vmem:[%s164 + $0x8] sm:$0xff]
      %v203 = vld [vmem:[%s164 + $0x10] sm:$0xff]
      %v204 = vld [vmem:[%s164 + $0x18] sm:$0xff]
      %v205 = vld [vmem:[%s164 + $0x20] sm:$0xff]
      %v206 = vld [vmem:[%s164 + $0x28] sm:$0xff]
      %v207 = vld [vmem:[%s164 + $0x30] sm:$0xff]
      %v208 = vld [vmem:[%s164 + $0x38] sm:$0xff]
      %v209 = vld [vmem:[%s164 + $0x40] sm:$0xff]
      %v210 = vld [vmem:[%s164 + $0x48] sm:$0xff]
      %v211 = vld [vmem:[%s164 + $0x50] sm:$0xff]
      %v212 = vld [vmem:[%s164 + $0x58] sm:$0xff]
      %v213 = vld [vmem:[%s164 + $0x60] sm:$0xff]
      %v214 = vld [vmem:[%s164 + $0x68] sm:$0xff]
      %v215 = vld [vmem:[%s164 + $0x70] sm:$0xff]
      %v216 = vld [vmem:[%s164 + $0x78] sm:$0xff]
      %v217 = vld [vmem:[%s164 + $0x80] sm:$0xff]
      %v218 = vld [vmem:[%s164 + $0x88] sm:$0xff]
      %v219 = vld [vmem:[%s164 + $0x90] sm:$0xff]
      %v220 = vld [vmem:[%s164 + $0x98] sm:$0xff]
      %v221 = vld [vmem:[%s164 + $0xa0] sm:$0xff]
      %v222 = vld [vmem:[%s164 + $0xa8] sm:$0xff]
      %v223 = vld [vmem:[%s164 + $0xb0] sm:$0xff]
      %v224 = vld [vmem:[%s164 + $0xb8] sm:$0xff]
      %v225 = vld [vmem:[%s164 + $0xc0] sm:$0xff]
      %v226 = vld [vmem:[%s164 + $0xc8] sm:$0xff]
      %v227 = vld [vmem:[%s164 + $0xd0] sm:$0xff]
      %v228 = vld [vmem:[%s164 + $0xd8] sm:$0xff]
      %v229 = vld [vmem:[%s164 + $0xe0] sm:$0xff]
      %v230 = vld [vmem:[%s164 + $0xe8] sm:$0xff]
      %v231 = vld [vmem:[%s164 + $0xf0] sm:$0xff]
      %v232 = vld [vmem:[%s164 + $0xf8] sm:$0xff]
      %v233 = vld [vmem:[%s164 + $0x100] sm:$0xff]
      %v234 = vld [vmem:[%s164 + $0x108] sm:$0xff]
      %v235 = vld [vmem:[%s164 + $0x110] sm:$0xff]
      %v236 = vld [vmem:[%s164 + $0x118] sm:$0xff]
      %v237 = vld [vmem:[%s164 + $0x120] sm:$0xff]
      %v238 = vld [vmem:[%s164 + $0x128] sm:$0xff]
      %v239 = vld [vmem:[%s164 + $0x130] sm:$0xff]
      %v240 = vld [vmem:[%s164 + $0x138] sm:$0xff]
      %v241 = vld [vmem:[%s164 + $0x140] sm:$0xff]
      %v242 = vld [vmem:[%s164 + $0x148] sm:$0xff]
      %v243 = vld [vmem:[%s164 + $0x150] sm:$0xff]
      %v244 = vld [vmem:[%s164 + $0x158] sm:$0xff]
      %v245 = vld [vmem:[%s164 + $0x160] sm:$0xff]
      %v246 = vld [vmem:[%s164 + $0x168] sm:$0xff]
      %v247 = vld [vmem:[%s164 + $0x170] sm:$0xff]
      %v248 = vld [vmem:[%s164 + $0x178] sm:$0xff]
      %v249 = vld [vmem:[%s164 + $0x180] sm:$0xff]
      %v250 = vld [vmem:[%s164 + $0x188] sm:$0xff]
      %v251 = vld [vmem:[%s164 + $0x190] sm:$0xff]
      %v252 = vld [vmem:[%s164 + $0x198] sm:$0xff]
      %v253 = vld [vmem:[%s164 + $0x1a0] sm:$0xff]
      %v254 = vld [vmem:[%s164 + $0x1a8] sm:$0xff]
      %v255 = vld [vmem:[%s164 + $0x1b0] sm:$0xff]
      %v256 = vld [vmem:[%s164 + $0x1b8] sm:$0xff]
      %v257 = vld [vmem:[%s164 + $0x1c0] sm:$0xff]
      %v258 = vld [vmem:[%s164 + $0x1c8] sm:$0xff]
      %v259 = vld [vmem:[%s164 + $0x1d0] sm:$0xff]
      %v260 = vld [vmem:[%s164 + $0x1d8] sm:$0xff]
      %v261 = vld [vmem:[%s164 + $0x1e0] sm:$0xff]
      %v262 = vld [vmem:[%s164 + $0x1e8] sm:$0xff]
      %v263 = vld [vmem:[%s164 + $0x1f0] sm:$0xff]
      %v264 = vld [vmem:[%s164 + $0x1f8] sm:$0xff]
      %s265 = scalar_lea.vmem %s164, 512
      %v266 = vld [vmem:[%s265] sm:$0xff]
      %v267 = vld [vmem:[%s265 + $0x8] sm:$0xff]
      %v268 = vld [vmem:[%s265 + $0x10] sm:$0xff]
      %v269 = vld [vmem:[%s265 + $0x18] sm:$0xff]
      %v270 = vld [vmem:[%s265 + $0x20] sm:$0xff]
      %v271 = vld [vmem:[%s265 + $0x28] sm:$0xff]
      %v272 = vld [vmem:[%s265 + $0x30] sm:$0xff]
      %v273 = vld [vmem:[%s265 + $0x38] sm:$0xff]
      %v274 = vld [vmem:[%s265 + $0x40] sm:$0xff]
      %v275 = vld [vmem:[%s265 + $0x48] sm:$0xff]
      %v276 = vld [vmem:[%s265 + $0x50] sm:$0xff]
      %v277 = vld [vmem:[%s265 + $0x58] sm:$0xff]
      %v278 = vld [vmem:[%s265 + $0x60] sm:$0xff]
      %v279 = vld [vmem:[%s265 + $0x68] sm:$0xff]
      %v280 = vld [vmem:[%s265 + $0x70] sm:$0xff]
      %v281 = vld [vmem:[%s265 + $0x78] sm:$0xff]
      %v282 = vld [vmem:[%s265 + $0x80] sm:$0xff]
      %v283 = vld [vmem:[%s265 + $0x88] sm:$0xff]
      %v284 = vld [vmem:[%s265 + $0x90] sm:$0xff]
      %v285 = vld [vmem:[%s265 + $0x98] sm:$0xff]
      %v286 = vld [vmem:[%s265 + $0xa0] sm:$0xff]
      %v287 = vld [vmem:[%s265 + $0xa8] sm:$0xff]
      %v288 = vld [vmem:[%s265 + $0xb0] sm:$0xff]
      %v289 = vld [vmem:[%s265 + $0xb8] sm:$0xff]
      %v290 = vld [vmem:[%s265 + $0xc0] sm:$0xff]
      %v291 = vld [vmem:[%s265 + $0xc8] sm:$0xff]
      %v292 = vld [vmem:[%s265 + $0xd0] sm:$0xff]
      %v293 = vld [vmem:[%s265 + $0xd8] sm:$0xff]
      %v294 = vld [vmem:[%s265 + $0xe0] sm:$0xff]
      %v295 = vld [vmem:[%s265 + $0xe8] sm:$0xff]
      %v296 = vld [vmem:[%s265 + $0xf0] sm:$0xff]
      %v297 = vld [vmem:[%s265 + $0xf8] sm:$0xff]
      %v298 = vld [vmem:[%s265 + $0x100] sm:$0xff]
      %v299 = vld [vmem:[%s265 + $0x108] sm:$0xff]
      %v300 = vld [vmem:[%s265 + $0x110] sm:$0xff]
      %v301 = vld [vmem:[%s265 + $0x118] sm:$0xff]
      %v302 = vld [vmem:[%s265 + $0x120] sm:$0xff]
      %v303 = vld [vmem:[%s265 + $0x128] sm:$0xff]
      %v304 = vld [vmem:[%s265 + $0x130] sm:$0xff]
      %v305 = vld [vmem:[%s265 + $0x138] sm:$0xff]
      %v306 = vld [vmem:[%s265 + $0x140] sm:$0xff]
      %v307 = vld [vmem:[%s265 + $0x148] sm:$0xff]
      %v308 = vld [vmem:[%s265 + $0x150] sm:$0xff]
      %v309 = vld [vmem:[%s265 + $0x158] sm:$0xff]
      %v310 = vld [vmem:[%s265 + $0x160] sm:$0xff]
      %v311 = vld [vmem:[%s265 + $0x168] sm:$0xff]
      %v312 = vld [vmem:[%s265 + $0x170] sm:$0xff]
      %v313 = vld [vmem:[%s265 + $0x178] sm:$0xff]
      %v314 = vld [vmem:[%s265 + $0x180] sm:$0xff]
      %v315 = vld [vmem:[%s265 + $0x188] sm:$0xff]
      %v316 = vld [vmem:[%s265 + $0x190] sm:$0xff]
      %v317 = vld [vmem:[%s265 + $0x198] sm:$0xff]
      %v318 = vld [vmem:[%s265 + $0x1a0] sm:$0xff]
      %v319 = vld [vmem:[%s265 + $0x1a8] sm:$0xff]
      %v320 = vld [vmem:[%s265 + $0x1b0] sm:$0xff]
      %v321 = vld [vmem:[%s265 + $0x1b8] sm:$0xff]
      %v322 = vld [vmem:[%s265 + $0x1c0] sm:$0xff]
      %v323 = vld [vmem:[%s265 + $0x1c8] sm:$0xff]
      %v324 = vld [vmem:[%s265 + $0x1d0] sm:$0xff]
      %v325 = vld [vmem:[%s265 + $0x1d8] sm:$0xff]
      %v326 = vld [vmem:[%s265 + $0x1e0] sm:$0xff]
      %v327 = vld [vmem:[%s265 + $0x1e8] sm:$0xff]
      %v328 = vld [vmem:[%s265 + $0x1f0] sm:$0xff]
      %v329 = vld [vmem:[%s265 + $0x1f8] sm:$0xff]
      %330 = vmatprep.subr.mxu0 %v202
      %331 = vmatpush1.msra.mxu0 %v201
      %332 = vmatprep.subr.mxu0 %v204
      %333 = vmatpush1.msra.mxu0 %v203
      %334 = vmatprep.subr.mxu0 %v206
      %335 = vmatpush1.msra.mxu0 %v205
      %336 = vmatprep.subr.mxu0 %v208
      %337 = vmatpush1.msra.mxu0 %v207
      %338 = vmatprep.subr.mxu0 %v210
      %339 = vmatpush1.msra.mxu0 %v209
      %340 = vmatprep.subr.mxu0 %v212
      %341 = vmatpush1.msra.mxu0 %v211
      %342 = vmatprep.subr.mxu0 %v214
      %343 = vmatpush1.msra.mxu0 %v213
      %344 = vmatprep.subr.mxu0 %v216
      %345 = vmatpush1.msra.mxu0 %v215
      %346 = vmatprep.subr.mxu0 %v218
      %347 = vmatpush1.msra.mxu0 %v217
      %348 = vmatprep.subr.mxu0 %v220
      %349 = vmatpush1.msra.mxu0 %v219
      %350 = vmatprep.subr.mxu0 %v222
      %351 = vmatpush1.msra.mxu0 %v221
      %352 = vmatprep.subr.mxu0 %v224
      %353 = vmatpush1.msra.mxu0 %v223
      %354 = vmatprep.subr.mxu0 %v226
      %355 = vmatpush1.msra.mxu0 %v225
      %356 = vmatprep.subr.mxu0 %v228
      %357 = vmatpush1.msra.mxu0 %v227
      %358 = vmatprep.subr.mxu0 %v230
      %359 = vmatpush1.msra.mxu0 %v229
      %360 = vmatprep.subr.mxu0 %v232
      %361 = vmatpush1.msra.mxu0 %v231
      %362 = vmatprep.subr.mxu0 %v234
      %363 = vmatpush1.msra.mxu0 %v233
      %364 = vmatprep.subr.mxu0 %v236
      %365 = vmatpush1.msra.mxu0 %v235
      %366 = vmatprep.subr.mxu0 %v238
      %367 = vmatpush1.msra.mxu0 %v237
      %368 = vmatprep.subr.mxu0 %v240
      %369 = vmatpush1.msra.mxu0 %v239
      %370 = vmatprep.subr.mxu0 %v242
      %371 = vmatpush1.msra.mxu0 %v241
      %372 = vmatprep.subr.mxu0 %v244
      %373 = vmatpush1.msra.mxu0 %v243
      %374 = vmatprep.subr.mxu0 %v246
      %375 = vmatpush1.msra.mxu0 %v245
      %376 = vmatprep.subr.mxu0 %v248
      %377 = vmatpush1.msra.mxu0 %v247
      %378 = vmatprep.subr.mxu0 %v250
      %379 = vmatpush1.msra.mxu0 %v249
      %380 = vmatprep.subr.mxu0 %v252
      %381 = vmatpush1.msra.mxu0 %v251
      %382 = vmatprep.subr.mxu0 %v254
      %383 = vmatpush1.msra.mxu0 %v253
      %384 = vmatprep.subr.mxu0 %v256
      %385 = vmatpush1.msra.mxu0 %v255
      %386 = vmatprep.subr.mxu0 %v258
      %387 = vmatpush1.msra.mxu0 %v257
      %388 = vmatprep.subr.mxu0 %v260
      %389 = vmatpush1.msra.mxu0 %v259
      %390 = vmatprep.subr.mxu0 %v262
      %391 = vmatpush1.msra.mxu0 %v261
      %392 = vmatprep.subr.mxu0 %v264
      %393 = vmatpush1.msra.mxu0 %v263
      %394 = vmatprep.mubr.f32.mxu0 %v185
      %395 = vmatmul.mubr.f32.gmra.mrb[0].mxu0 %v184
      %v396 = vpop.f32.mrb[0].mxu0
      %v397 = vadd.f32 0.0, %v396
      %v398 = vpop.f32.mrb[0].mxu0
      %v399 = vadd.f32 0.0, %v398
      %400 = vdwg.mxu0
      %401 = vmatprep.subr.mxu0 %v267
      %402 = vmatpush1.msra.mxu0 %v266
      %403 = vmatprep.subr.mxu0 %v269
      %404 = vmatpush1.msra.mxu0 %v268
      %405 = vmatprep.subr.mxu0 %v271
      %406 = vmatpush1.msra.mxu0 %v270
      %407 = vmatprep.subr.mxu0 %v273
      %408 = vmatpush1.msra.mxu0 %v272
      %409 = vmatprep.subr.mxu0 %v275
      %410 = vmatpush1.msra.mxu0 %v274
      %411 = vmatprep.subr.mxu0 %v277
      %412 = vmatpush1.msra.mxu0 %v276
      %413 = vmatprep.subr.mxu0 %v279
      %414 = vmatpush1.msra.mxu0 %v278
      %415 = vmatprep.subr.mxu0 %v281
      %416 = vmatpush1.msra.mxu0 %v280
      %417 = vmatprep.subr.mxu0 %v283
      %418 = vmatpush1.msra.mxu0 %v282
      %419 = vmatprep.subr.mxu0 %v285
      %420 = vmatpush1.msra.mxu0 %v284
      %421 = vmatprep.subr.mxu0 %v287
      %422 = vmatpush1.msra.mxu0 %v286
      %423 = vmatprep.subr.mxu0 %v289
      %424 = vmatpush1.msra.mxu0 %v288
      %425 = vmatprep.subr.mxu0 %v291
      %426 = vmatpush1.msra.mxu0 %v290
      %427 = vmatprep.subr.mxu0 %v293
      %428 = vmatpush1.msra.mxu0 %v292
      %429 = vmatprep.subr.mxu0 %v295
      %430 = vmatpush1.msra.mxu0 %v294
      %431 = vmatprep.subr.mxu0 %v297
      %432 = vmatpush1.msra.mxu0 %v296
      %433 = vmatprep.subr.mxu0 %v299
      %434 = vmatpush1.msra.mxu0 %v298
      %435 = vmatprep.subr.mxu0 %v301
      %436 = vmatpush1.msra.mxu0 %v300
      %437 = vmatprep.subr.mxu0 %v303
      %438 = vmatpush1.msra.mxu0 %v302
      %439 = vmatprep.subr.mxu0 %v305
      %440 = vmatpush1.msra.mxu0 %v304
      %441 = vmatprep.subr.mxu0 %v307
      %442 = vmatpush1.msra.mxu0 %v306
      %443 = vmatprep.subr.mxu0 %v309
      %444 = vmatpush1.msra.mxu0 %v308
      %445 = vmatprep.subr.mxu0 %v311
      %446 = vmatpush1.msra.mxu0 %v310
      %447 = vmatprep.subr.mxu0 %v313
      %448 = vmatpush1.msra.mxu0 %v312
      %449 = vmatprep.subr.mxu0 %v315
      %450 = vmatpush1.msra.mxu0 %v314
      %451 = vmatprep.subr.mxu0 %v317
      %452 = vmatpush1.msra.mxu0 %v316
      %453 = vmatprep.subr.mxu0 %v319
      %454 = vmatpush1.msra.mxu0 %v318
      %455 = vmatprep.subr.mxu0 %v321
      %456 = vmatpush1.msra.mxu0 %v320
      %457 = vmatprep.subr.mxu0 %v323
      %458 = vmatpush1.msra.mxu0 %v322
      %459 = vmatprep.subr.mxu0 %v325
      %460 = vmatpush1.msra.mxu0 %v324
      %461 = vmatprep.subr.mxu0 %v327
      %462 = vmatpush1.msra.mxu0 %v326
      %463 = vmatprep.subr.mxu0 %v329
      %464 = vmatpush1.msra.mxu0 %v328
      %465 = vmatprep.mubr.f32.mxu0 %v200
      %466 = vmatmul.mubr.f32.gmra.mrb[0].mxu0 %v199
      %v467 = vpop.f32.mrb[0].mxu0
      %v468 = vadd.f32 0.0, %v467
      %v469 = vpop.f32.mrb[0].mxu0
      %v470 = vadd.f32 0.0, %v469
      %471 = vdwg.mxu0
      %v472 = vsub.f32 %v397, %v468
      %v473 = vsub.f32 %v399, %v470
      %474 = vmatprep.subr.mxu0 %v202
      %475 = vmatpush1.msra.mxu0 %v201
      %476 = vmatprep.subr.mxu0 %v204
      %477 = vmatpush1.msra.mxu0 %v203
      %478 = vmatprep.subr.mxu0 %v206
      %479 = vmatpush1.msra.mxu0 %v205
      %480 = vmatprep.subr.mxu0 %v208
      %481 = vmatpush1.msra.mxu0 %v207
      %482 = vmatprep.subr.mxu0 %v210
      %483 = vmatpush1.msra.mxu0 %v209
      %484 = vmatprep.subr.mxu0 %v212
      %485 = vmatpush1.msra.mxu0 %v211
      %486 = vmatprep.subr.mxu0 %v214
      %487 = vmatpush1.msra.mxu0 %v213
      %488 = vmatprep.subr.mxu0 %v216
      %489 = vmatpush1.msra.mxu0 %v215
      %490 = vmatprep.subr.mxu0 %v218
      %491 = vmatpush1.msra.mxu0 %v217
      %492 = vmatprep.subr.mxu0 %v220
      %493 = vmatpush1.msra.mxu0 %v219
      %494 = vmatprep.subr.mxu0 %v222
      %495 = vmatpush1.msra.mxu0 %v221
      %496 = vmatprep.subr.mxu0 %v224
      %497 = vmatpush1.msra.mxu0 %v223
      %498 = vmatprep.subr.mxu0 %v226
      %499 = vmatpush1.msra.mxu0 %v225
      %500 = vmatprep.subr.mxu0 %v228
      %501 = vmatpush1.msra.mxu0 %v227
      %502 = vmatprep.subr.mxu0 %v230
      %503 = vmatpush1.msra.mxu0 %v229
      %504 = vmatprep.subr.mxu0 %v232
      %505 = vmatpush1.msra.mxu0 %v231
      %506 = vmatprep.subr.mxu0 %v234
      %507 = vmatpush1.msra.mxu0 %v233
      %508 = vmatprep.subr.mxu0 %v236
      %509 = vmatpush1.msra.mxu0 %v235
      %510 = vmatprep.subr.mxu0 %v238
      %511 = vmatpush1.msra.mxu0 %v237
      %512 = vmatprep.subr.mxu0 %v240
      %513 = vmatpush1.msra.mxu0 %v239
      %514 = vmatprep.subr.mxu0 %v242
      %515 = vmatpush1.msra.mxu0 %v241
      %516 = vmatprep.subr.mxu0 %v244
      %517 = vmatpush1.msra.mxu0 %v243
      %518 = vmatprep.subr.mxu0 %v246
      %519 = vmatpush1.msra.mxu0 %v245
      %520 = vmatprep.subr.mxu0 %v248
      %521 = vmatpush1.msra.mxu0 %v247
      %522 = vmatprep.subr.mxu0 %v250
      %523 = vmatpush1.msra.mxu0 %v249
      %524 = vmatprep.subr.mxu0 %v252
      %525 = vmatpush1.msra.mxu0 %v251
      %526 = vmatprep.subr.mxu0 %v254
      %527 = vmatpush1.msra.mxu0 %v253
      %528 = vmatprep.subr.mxu0 %v256
      %529 = vmatpush1.msra.mxu0 %v255
      %530 = vmatprep.subr.mxu0 %v258
      %531 = vmatpush1.msra.mxu0 %v257
      %532 = vmatprep.subr.mxu0 %v260
      %533 = vmatpush1.msra.mxu0 %v259
      %534 = vmatprep.subr.mxu0 %v262
      %535 = vmatpush1.msra.mxu0 %v261
      %536 = vmatprep.subr.mxu0 %v264
      %537 = vmatpush1.msra.mxu0 %v263
      %538 = vmatprep.mubr.f32.mxu0 %v200
      %539 = vmatmul.mubr.f32.gmra.mrb[0].mxu0 %v199
      %v540 = vpop.f32.mrb[0].mxu0
      %v541 = vadd.f32 0.0, %v540
      %v542 = vpop.f32.mrb[0].mxu0
      %v543 = vadd.f32 0.0, %v542
      %544 = vdwg.mxu0
      %545 = vmatprep.subr.mxu0 %v267
      %546 = vmatpush1.msra.mxu0 %v266
      %547 = vmatprep.subr.mxu0 %v269
      %548 = vmatpush1.msra.mxu0 %v268
      %549 = vmatprep.subr.mxu0 %v271
      %550 = vmatpush1.msra.mxu0 %v270
      %551 = vmatprep.subr.mxu0 %v273
      %552 = vmatpush1.msra.mxu0 %v272
      %553 = vmatprep.subr.mxu0 %v275
      %554 = vmatpush1.msra.mxu0 %v274
      %555 = vmatprep.subr.mxu0 %v277
      %556 = vmatpush1.msra.mxu0 %v276
      %557 = vmatprep.subr.mxu0 %v279
      %558 = vmatpush1.msra.mxu0 %v278
      %559 = vmatprep.subr.mxu0 %v281
      %560 = vmatpush1.msra.mxu0 %v280
      %561 = vmatprep.subr.mxu0 %v283
      %562 = vmatpush1.msra.mxu0 %v282
      %563 = vmatprep.subr.mxu0 %v285
      %564 = vmatpush1.msra.mxu0 %v284
      %565 = vmatprep.subr.mxu0 %v287
      %566 = vmatpush1.msra.mxu0 %v286
      %567 = vmatprep.subr.mxu0 %v289
      %568 = vmatpush1.msra.mxu0 %v288
      %569 = vmatprep.subr.mxu0 %v291
      %570 = vmatpush1.msra.mxu0 %v290
      %571 = vmatprep.subr.mxu0 %v293
      %572 = vmatpush1.msra.mxu0 %v292
      %573 = vmatprep.subr.mxu0 %v295
      %574 = vmatpush1.msra.mxu0 %v294
      %575 = vmatprep.subr.mxu0 %v297
      %576 = vmatpush1.msra.mxu0 %v296
      %577 = vmatprep.subr.mxu0 %v299
      %578 = vmatpush1.msra.mxu0 %v298
      %579 = vmatprep.subr.mxu0 %v301
      %580 = vmatpush1.msra.mxu0 %v300
      %581 = vmatprep.subr.mxu0 %v303
      %582 = vmatpush1.msra.mxu0 %v302
      %583 = vmatprep.subr.mxu0 %v305
      %584 = vmatpush1.msra.mxu0 %v304
      %585 = vmatprep.subr.mxu0 %v307
      %586 = vmatpush1.msra.mxu0 %v306
      %587 = vmatprep.subr.mxu0 %v309
      %588 = vmatpush1.msra.mxu0 %v308
      %589 = vmatprep.subr.mxu0 %v311
      %590 = vmatpush1.msra.mxu0 %v310
      %591 = vmatprep.subr.mxu0 %v313
      %592 = vmatpush1.msra.mxu0 %v312
      %593 = vmatprep.subr.mxu0 %v315
      %594 = vmatpush1.msra.mxu0 %v314
      %595 = vmatprep.subr.mxu0 %v317
      %596 = vmatpush1.msra.mxu0 %v316
      %597 = vmatprep.subr.mxu0 %v319
      %598 = vmatpush1.msra.mxu0 %v318
      %599 = vmatprep.subr.mxu0 %v321
      %600 = vmatpush1.msra.mxu0 %v320
      %601 = vmatprep.subr.mxu0 %v323
      %602 = vmatpush1.msra.mxu0 %v322
      %603 = vmatprep.subr.mxu0 %v325
      %604 = vmatpush1.msra.mxu0 %v324
      %605 = vmatprep.subr.mxu0 %v327
      %606 = vmatpush1.msra.mxu0 %v326
      %607 = vmatprep.subr.mxu0 %v329
      %608 = vmatpush1.msra.mxu0 %v328
      %609 = vmatprep.mubr.f32.mxu0 %v185
      %610 = vmatmul.mubr.f32.gmra.mrb[0].mxu0 %v184
      %v611 = vpop.f32.mrb[0].mxu0
      %v612 = vadd.f32 %v541, %v611
      %v613 = vpop.f32.mrb[0].mxu0
      %v614 = vadd.f32 %v543, %v613
      %615 = vdwg.mxu0
      %s616 = scalar_lea.vmem %s164, 1024
      %v617 = vld [vmem:[%s616] sm:$0xff]
      %v618 = vld [vmem:[%s616 + $0x8] sm:$0xff]
      %v619 = vld [vmem:[%s616 + $0x10] sm:$0xff]
      %v620 = vld [vmem:[%s616 + $0x18] sm:$0xff]
      %v621 = vld [vmem:[%s616 + $0x20] sm:$0xff]
      %v622 = vld [vmem:[%s616 + $0x28] sm:$0xff]
      %v623 = vld [vmem:[%s616 + $0x30] sm:$0xff]
      %v624 = vld [vmem:[%s616 + $0x38] sm:$0xff]
      %v625 = vld [vmem:[%s616 + $0x40] sm:$0xff]
      %v626 = vld [vmem:[%s616 + $0x48] sm:$0xff]
      %v627 = vld [vmem:[%s616 + $0x50] sm:$0xff]
      %v628 = vld [vmem:[%s616 + $0x58] sm:$0xff]
      %v629 = vld [vmem:[%s616 + $0x60] sm:$0xff]
      %v630 = vld [vmem:[%s616 + $0x68] sm:$0xff]
      %v631 = vld [vmem:[%s616 + $0x70] sm:$0xff]
      %v632 = vld [vmem:[%s616 + $0x78] sm:$0xff]
      %v633 = vld [vmem:[%s616 + $0x80] sm:$0xff]
      %v634 = vld [vmem:[%s616 + $0x88] sm:$0xff]
      %v635 = vld [vmem:[%s616 + $0x90] sm:$0xff]
      %v636 = vld [vmem:[%s616 + $0x98] sm:$0xff]
      %v637 = vld [vmem:[%s616 + $0xa0] sm:$0xff]
      %v638 = vld [vmem:[%s616 + $0xa8] sm:$0xff]
      %v639 = vld [vmem:[%s616 + $0xb0] sm:$0xff]
      %v640 = vld [vmem:[%s616 + $0xb8] sm:$0xff]
      %v641 = vld [vmem:[%s616 + $0xc0] sm:$0xff]
      %v642 = vld [vmem:[%s616 + $0xc8] sm:$0xff]
      %v643 = vld [vmem:[%s616 + $0xd0] sm:$0xff]
      %v644 = vld [vmem:[%s616 + $0xd8] sm:$0xff]
      %v645 = vld [vmem:[%s616 + $0xe0] sm:$0xff]
      %v646 = vld [vmem:[%s616 + $0xe8] sm:$0xff]
      %v647 = vld [vmem:[%s616 + $0xf0] sm:$0xff]
      %v648 = vld [vmem:[%s616 + $0xf8] sm:$0xff]
      %v649 = vld [vmem:[%s616 + $0x100] sm:$0xff]
      %v650 = vld [vmem:[%s616 + $0x108] sm:$0xff]
      %v651 = vld [vmem:[%s616 + $0x110] sm:$0xff]
      %v652 = vld [vmem:[%s616 + $0x118] sm:$0xff]
      %v653 = vld [vmem:[%s616 + $0x120] sm:$0xff]
      %v654 = vld [vmem:[%s616 + $0x128] sm:$0xff]
      %v655 = vld [vmem:[%s616 + $0x130] sm:$0xff]
      %v656 = vld [vmem:[%s616 + $0x138] sm:$0xff]
      %v657 = vld [vmem:[%s616 + $0x140] sm:$0xff]
      %v658 = vld [vmem:[%s616 + $0x148] sm:$0xff]
      %v659 = vld [vmem:[%s616 + $0x150] sm:$0xff]
      %v660 = vld [vmem:[%s616 + $0x158] sm:$0xff]
      %v661 = vld [vmem:[%s616 + $0x160] sm:$0xff]
      %v662 = vld [vmem:[%s616 + $0x168] sm:$0xff]
      %v663 = vld [vmem:[%s616 + $0x170] sm:$0xff]
      %v664 = vld [vmem:[%s616 + $0x178] sm:$0xff]
      %v665 = vld [vmem:[%s616 + $0x180] sm:$0xff]
      %v666 = vld [vmem:[%s616 + $0x188] sm:$0xff]
      %v667 = vld [vmem:[%s616 + $0x190] sm:$0xff]
      %v668 = vld [vmem:[%s616 + $0x198] sm:$0xff]
      %v669 = vld [vmem:[%s616 + $0x1a0] sm:$0xff]
      %v670 = vld [vmem:[%s616 + $0x1a8] sm:$0xff]
      %v671 = vld [vmem:[%s616 + $0x1b0] sm:$0xff]
      %v672 = vld [vmem:[%s616 + $0x1b8] sm:$0xff]
      %v673 = vld [vmem:[%s616 + $0x1c0] sm:$0xff]
      %v674 = vld [vmem:[%s616 + $0x1c8] sm:$0xff]
      %v675 = vld [vmem:[%s616 + $0x1d0] sm:$0xff]
      %v676 = vld [vmem:[%s616 + $0x1d8] sm:$0xff]
      %v677 = vld [vmem:[%s616 + $0x1e0] sm:$0xff]
      %v678 = vld [vmem:[%s616 + $0x1e8] sm:$0xff]
      %v679 = vld [vmem:[%s616 + $0x1f0] sm:$0xff]
      %v680 = vld [vmem:[%s616 + $0x1f8] sm:$0xff]
      %s681 = scalar_lea.vmem %s164, 1536
      %v682 = vld [vmem:[%s681] sm:$0xff]
      %v683 = vld [vmem:[%s681 + $0x8] sm:$0xff]
      %v684 = vld [vmem:[%s681 + $0x10] sm:$0xff]
      %v685 = vld [vmem:[%s681 + $0x18] sm:$0xff]
      %v686 = vld [vmem:[%s681 + $0x20] sm:$0xff]
      %v687 = vld [vmem:[%s681 + $0x28] sm:$0xff]
      %v688 = vld [vmem:[%s681 + $0x30] sm:$0xff]
      %v689 = vld [vmem:[%s681 + $0x38] sm:$0xff]
      %v690 = vld [vmem:[%s681 + $0x40] sm:$0xff]
      %v691 = vld [vmem:[%s681 + $0x48] sm:$0xff]
      %v692 = vld [vmem:[%s681 + $0x50] sm:$0xff]
      %v693 = vld [vmem:[%s681 + $0x58] sm:$0xff]
      %v694 = vld [vmem:[%s681 + $0x60] sm:$0xff]
      %v695 = vld [vmem:[%s681 + $0x68] sm:$0xff]
      %v696 = vld [vmem:[%s681 + $0x70] sm:$0xff]
      %v697 = vld [vmem:[%s681 + $0x78] sm:$0xff]
      %v698 = vld [vmem:[%s681 + $0x80] sm:$0xff]
      %v699 = vld [vmem:[%s681 + $0x88] sm:$0xff]
      %v700 = vld [vmem:[%s681 + $0x90] sm:$0xff]
      %v701 = vld [vmem:[%s681 + $0x98] sm:$0xff]
      %v702 = vld [vmem:[%s681 + $0xa0] sm:$0xff]
      %v703 = vld [vmem:[%s681 + $0xa8] sm:$0xff]
      %v704 = vld [vmem:[%s681 + $0xb0] sm:$0xff]
      %v705 = vld [vmem:[%s681 + $0xb8] sm:$0xff]
      %v706 = vld [vmem:[%s681 + $0xc0] sm:$0xff]
      %v707 = vld [vmem:[%s681 + $0xc8] sm:$0xff]
      %v708 = vld [vmem:[%s681 + $0xd0] sm:$0xff]
      %v709 = vld [vmem:[%s681 + $0xd8] sm:$0xff]
      %v710 = vld [vmem:[%s681 + $0xe0] sm:$0xff]
      %v711 = vld [vmem:[%s681 + $0xe8] sm:$0xff]
      %v712 = vld [vmem:[%s681 + $0xf0] sm:$0xff]
      %v713 = vld [vmem:[%s681 + $0xf8] sm:$0xff]
      %v714 = vld [vmem:[%s681 + $0x100] sm:$0xff]
      %v715 = vld [vmem:[%s681 + $0x108] sm:$0xff]
      %v716 = vld [vmem:[%s681 + $0x110] sm:$0xff]
      %v717 = vld [vmem:[%s681 + $0x118] sm:$0xff]
      %v718 = vld [vmem:[%s681 + $0x120] sm:$0xff]
      %v719 = vld [vmem:[%s681 + $0x128] sm:$0xff]
      %v720 = vld [vmem:[%s681 + $0x130] sm:$0xff]
      %v721 = vld [vmem:[%s681 + $0x138] sm:$0xff]
      %v722 = vld [vmem:[%s681 + $0x140] sm:$0xff]
      %v723 = vld [vmem:[%s681 + $0x148] sm:$0xff]
      %v724 = vld [vmem:[%s681 + $0x150] sm:$0xff]
      %v725 = vld [vmem:[%s681 + $0x158] sm:$0xff]
      %v726 = vld [vmem:[%s681 + $0x160] sm:$0xff]
      %v727 = vld [vmem:[%s681 + $0x168] sm:$0xff]
      %v728 = vld [vmem:[%s681 + $0x170] sm:$0xff]
      %v729 = vld [vmem:[%s681 + $0x178] sm:$0xff]
      %v730 = vld [vmem:[%s681 + $0x180] sm:$0xff]
      %v731 = vld [vmem:[%s681 + $0x188] sm:$0xff]
      %v732 = vld [vmem:[%s681 + $0x190] sm:$0xff]
      %v733 = vld [vmem:[%s681 + $0x198] sm:$0xff]
      %v734 = vld [vmem:[%s681 + $0x1a0] sm:$0xff]
      %v735 = vld [vmem:[%s681 + $0x1a8] sm:$0xff]
      %v736 = vld [vmem:[%s681 + $0x1b0] sm:$0xff]
      %v737 = vld [vmem:[%s681 + $0x1b8] sm:$0xff]
      %v738 = vld [vmem:[%s681 + $0x1c0] sm:$0xff]
      %v739 = vld [vmem:[%s681 + $0x1c8] sm:$0xff]
      %v740 = vld [vmem:[%s681 + $0x1d0] sm:$0xff]
      %v741 = vld [vmem:[%s681 + $0x1d8] sm:$0xff]
      %v742 = vld [vmem:[%s681 + $0x1e0] sm:$0xff]
      %v743 = vld [vmem:[%s681 + $0x1e8] sm:$0xff]
      %v744 = vld [vmem:[%s681 + $0x1f0] sm:$0xff]
      %v745 = vld [vmem:[%s681 + $0x1f8] sm:$0xff]
      %746 = vmatprep.subr.mxu0 %v618
      %747 = vmatpush1.msra.mxu0 %v617
      %748 = vmatprep.subr.mxu0 %v620
      %749 = vmatpush1.msra.mxu0 %v619
      %750 = vmatprep.subr.mxu0 %v622
      %751 = vmatpush1.msra.mxu0 %v621
      %752 = vmatprep.subr.mxu0 %v624
      %753 = vmatpush1.msra.mxu0 %v623
      %754 = vmatprep.subr.mxu0 %v626
      %755 = vmatpush1.msra.mxu0 %v625
      %756 = vmatprep.subr.mxu0 %v628
      %757 = vmatpush1.msra.mxu0 %v627
      %758 = vmatprep.subr.mxu0 %v630
      %759 = vmatpush1.msra.mxu0 %v629
      %760 = vmatprep.subr.mxu0 %v632
      %761 = vmatpush1.msra.mxu0 %v631
      %762 = vmatprep.subr.mxu0 %v634
      %763 = vmatpush1.msra.mxu0 %v633
      %764 = vmatprep.subr.mxu0 %v636
      %765 = vmatpush1.msra.mxu0 %v635
      %766 = vmatprep.subr.mxu0 %v638
      %767 = vmatpush1.msra.mxu0 %v637
      %768 = vmatprep.subr.mxu0 %v640
      %769 = vmatpush1.msra.mxu0 %v639
      %770 = vmatprep.subr.mxu0 %v642
      %771 = vmatpush1.msra.mxu0 %v641
      %772 = vmatprep.subr.mxu0 %v644
      %773 = vmatpush1.msra.mxu0 %v643
      %774 = vmatprep.subr.mxu0 %v646
      %775 = vmatpush1.msra.mxu0 %v645
      %776 = vmatprep.subr.mxu0 %v648
      %777 = vmatpush1.msra.mxu0 %v647
      %778 = vmatprep.subr.mxu0 %v650
      %779 = vmatpush1.msra.mxu0 %v649
      %780 = vmatprep.subr.mxu0 %v652
      %781 = vmatpush1.msra.mxu0 %v651
      %782 = vmatprep.subr.mxu0 %v654
      %783 = vmatpush1.msra.mxu0 %v653
      %784 = vmatprep.subr.mxu0 %v656
      %785 = vmatpush1.msra.mxu0 %v655
      %786 = vmatprep.subr.mxu0 %v658
      %787 = vmatpush1.msra.mxu0 %v657
      %788 = vmatprep.subr.mxu0 %v660
      %789 = vmatpush1.msra.mxu0 %v659
      %790 = vmatprep.subr.mxu0 %v662
      %791 = vmatpush1.msra.mxu0 %v661
      %792 = vmatprep.subr.mxu0 %v664
      %793 = vmatpush1.msra.mxu0 %v663
      %794 = vmatprep.subr.mxu0 %v666
      %795 = vmatpush1.msra.mxu0 %v665
      %796 = vmatprep.subr.mxu0 %v668
      %797 = vmatpush1.msra.mxu0 %v667
      %798 = vmatprep.subr.mxu0 %v670
      %799 = vmatpush1.msra.mxu0 %v669
      %800 = vmatprep.subr.mxu0 %v672
      %801 = vmatpush1.msra.mxu0 %v671
      %802 = vmatprep.subr.mxu0 %v674
      %803 = vmatpush1.msra.mxu0 %v673
      %804 = vmatprep.subr.mxu0 %v676
      %805 = vmatpush1.msra.mxu0 %v675
      %806 = vmatprep.subr.mxu0 %v678
      %807 = vmatpush1.msra.mxu0 %v677
      %808 = vmatprep.subr.mxu0 %v680
      %809 = vmatpush1.msra.mxu0 %v679
      %810 = vmatprep.mubr.f32.mxu0 %v473
      %811 = vmatmul.mubr.f32.gmra.mrb[0].mxu0 %v472
      %v812 = vpop.f32.mrb[0].mxu0
      %v813 = vadd.f32 0.0, %v812
      %v814 = vpop.f32.mrb[0].mxu0
      %v815 = vadd.f32 0.0, %v814
      %816 = vdwg.mxu0
      %817 = vmatprep.subr.mxu0 %v683
      %818 = vmatpush1.msra.mxu0 %v682
      %819 = vmatprep.subr.mxu0 %v685
      %820 = vmatpush1.msra.mxu0 %v684
      %821 = vmatprep.subr.mxu0 %v687
      %822 = vmatpush1.msra.mxu0 %v686
      %823 = vmatprep.subr.mxu0 %v689
      %824 = vmatpush1.msra.mxu0 %v688
      %825 = vmatprep.subr.mxu0 %v691
      %826 = vmatpush1.msra.mxu0 %v690
      %827 = vmatprep.subr.mxu0 %v693
      %828 = vmatpush1.msra.mxu0 %v692
      %829 = vmatprep.subr.mxu0 %v695
      %830 = vmatpush1.msra.mxu0 %v694
      %831 = vmatprep.subr.mxu0 %v697
      %832 = vmatpush1.msra.mxu0 %v696
      %833 = vmatprep.subr.mxu0 %v699
      %834 = vmatpush1.msra.mxu0 %v698
      %835 = vmatprep.subr.mxu0 %v701
      %836 = vmatpush1.msra.mxu0 %v700
      %837 = vmatprep.subr.mxu0 %v703
      %838 = vmatpush1.msra.mxu0 %v702
      %839 = vmatprep.subr.mxu0 %v705
      %840 = vmatpush1.msra.mxu0 %v704
      %841 = vmatprep.subr.mxu0 %v707
      %842 = vmatpush1.msra.mxu0 %v706
      %843 = vmatprep.subr.mxu0 %v709
      %844 = vmatpush1.msra.mxu0 %v708
      %845 = vmatprep.subr.mxu0 %v711
      %846 = vmatpush1.msra.mxu0 %v710
      %847 = vmatprep.subr.mxu0 %v713
      %848 = vmatpush1.msra.mxu0 %v712
      %849 = vmatprep.subr.mxu0 %v715
      %850 = vmatpush1.msra.mxu0 %v714
      %851 = vmatprep.subr.mxu0 %v717
      %852 = vmatpush1.msra.mxu0 %v716
      %853 = vmatprep.subr.mxu0 %v719
      %854 = vmatpush1.msra.mxu0 %v718
      %855 = vmatprep.subr.mxu0 %v721
      %856 = vmatpush1.msra.mxu0 %v720
      %857 = vmatprep.subr.mxu0 %v723
      %858 = vmatpush1.msra.mxu0 %v722
      %859 = vmatprep.subr.mxu0 %v725
      %860 = vmatpush1.msra.mxu0 %v724
      %861 = vmatprep.subr.mxu0 %v727
      %862 = vmatpush1.msra.mxu0 %v726
      %863 = vmatprep.subr.mxu0 %v729
      %864 = vmatpush1.msra.mxu0 %v728
      %865 = vmatprep.subr.mxu0 %v731
      %866 = vmatpush1.msra.mxu0 %v730
      %867 = vmatprep.subr.mxu0 %v733
      %868 = vmatpush1.msra.mxu0 %v732
      %869 = vmatprep.subr.mxu0 %v735
      %870 = vmatpush1.msra.mxu0 %v734
      %871 = vmatprep.subr.mxu0 %v737
      %872 = vmatpush1.msra.mxu0 %v736
      %873 = vmatprep.subr.mxu0 %v739
      %874 = vmatpush1.msra.mxu0 %v738
      %875 = vmatprep.subr.mxu0 %v741
      %876 = vmatpush1.msra.mxu0 %v740
      %877 = vmatprep.subr.mxu0 %v743
      %878 = vmatpush1.msra.mxu0 %v742
      %879 = vmatprep.subr.mxu0 %v745
      %880 = vmatpush1.msra.mxu0 %v744
      %881 = vmatprep.mubr.f32.mxu0 %v614
      %882 = vmatmul.mubr.f32.gmra.mrb[0].mxu0 %v612
      %v883 = vpop.f32.mrb[0].mxu0
      %v884 = vadd.f32 0.0, %v883
      %v885 = vpop.f32.mrb[0].mxu0
      %v886 = vadd.f32 0.0, %v885
      %887 = vdwg.mxu0
      %v888 = vsub.f32 %v813, %v884
      %v889 = vsub.f32 %v815, %v886
      %890 = vmatprep.subr.mxu0 %v618
      %891 = vmatpush1.msra.mxu0 %v617
      %892 = vmatprep.subr.mxu0 %v620
      %893 = vmatpush1.msra.mxu0 %v619
      %894 = vmatprep.subr.mxu0 %v622
      %895 = vmatpush1.msra.mxu0 %v621
      %896 = vmatprep.subr.mxu0 %v624
      %897 = vmatpush1.msra.mxu0 %v623
      %898 = vmatprep.subr.mxu0 %v626
      %899 = vmatpush1.msra.mxu0 %v625
      %900 = vmatprep.subr.mxu0 %v628
      %901 = vmatpush1.msra.mxu0 %v627
      %902 = vmatprep.subr.mxu0 %v630
      %903 = vmatpush1.msra.mxu0 %v629
      %904 = vmatprep.subr.mxu0 %v632
      %905 = vmatpush1.msra.mxu0 %v631
      %906 = vmatprep.subr.mxu0 %v634
      %907 = vmatpush1.msra.mxu0 %v633
      %908 = vmatprep.subr.mxu0 %v636
      %909 = vmatpush1.msra.mxu0 %v635
      %910 = vmatprep.subr.mxu0 %v638
      %911 = vmatpush1.msra.mxu0 %v637
      %912 = vmatprep.subr.mxu0 %v640
      %913 = vmatpush1.msra.mxu0 %v639
      %914 = vmatprep.subr.mxu0 %v642
      %915 = vmatpush1.msra.mxu0 %v641
      %916 = vmatprep.subr.mxu0 %v644
      %917 = vmatpush1.msra.mxu0 %v643
      %918 = vmatprep.subr.mxu0 %v646
      %919 = vmatpush1.msra.mxu0 %v645
      %920 = vmatprep.subr.mxu0 %v648
      %921 = vmatpush1.msra.mxu0 %v647
      %922 = vmatprep.subr.mxu0 %v650
      %923 = vmatpush1.msra.mxu0 %v649
      %924 = vmatprep.subr.mxu0 %v652
      %925 = vmatpush1.msra.mxu0 %v651
      %926 = vmatprep.subr.mxu0 %v654
      %927 = vmatpush1.msra.mxu0 %v653
      %928 = vmatprep.subr.mxu0 %v656
      %929 = vmatpush1.msra.mxu0 %v655
      %930 = vmatprep.subr.mxu0 %v658
      %931 = vmatpush1.msra.mxu0 %v657
      %932 = vmatprep.subr.mxu0 %v660
      %933 = vmatpush1.msra.mxu0 %v659
      %934 = vmatprep.subr.mxu0 %v662
      %935 = vmatpush1.msra.mxu0 %v661
      %936 = vmatprep.subr.mxu0 %v664
      %937 = vmatpush1.msra.mxu0 %v663
      %938 = vmatprep.subr.mxu0 %v666
      %939 = vmatpush1.msra.mxu0 %v665
      %940 = vmatprep.subr.mxu0 %v668
      %941 = vmatpush1.msra.mxu0 %v667
      %942 = vmatprep.subr.mxu0 %v670
      %943 = vmatpush1.msra.mxu0 %v669
      %944 = vmatprep.subr.mxu0 %v672
      %945 = vmatpush1.msra.mxu0 %v671
      %946 = vmatprep.subr.mxu0 %v674
      %947 = vmatpush1.msra.mxu0 %v673
      %948 = vmatprep.subr.mxu0 %v676
      %949 = vmatpush1.msra.mxu0 %v675
      %950 = vmatprep.subr.mxu0 %v678
      %951 = vmatpush1.msra.mxu0 %v677
      %952 = vmatprep.subr.mxu0 %v680
      %953 = vmatpush1.msra.mxu0 %v679
      %954 = vmatprep.mubr.f32.mxu0 %v614
      %955 = vmatmul.mubr.f32.gmra.mrb[0].mxu0 %v612
      %v956 = vpop.f32.mrb[0].mxu0
      %v957 = vadd.f32 0.0, %v956
      %v958 = vpop.f32.mrb[0].mxu0
      %v959 = vadd.f32 0.0, %v958
      %960 = vdwg.mxu0
      %961 = vmatprep.subr.mxu0 %v683
      %962 = vmatpush1.msra.mxu0 %v682
      %963 = vmatprep.subr.mxu0 %v685
      %964 = vmatpush1.msra.mxu0 %v684
      %965 = vmatprep.subr.mxu0 %v687
      %966 = vmatpush1.msra.mxu0 %v686
      %967 = vmatprep.subr.mxu0 %v689
      %968 = vmatpush1.msra.mxu0 %v688
      %969 = vmatprep.subr.mxu0 %v691
      %970 = vmatpush1.msra.mxu0 %v690
      %971 = vmatprep.subr.mxu0 %v693
      %972 = vmatpush1.msra.mxu0 %v692
      %973 = vmatprep.subr.mxu0 %v695
      %974 = vmatpush1.msra.mxu0 %v694
      %975 = vmatprep.subr.mxu0 %v697
      %976 = vmatpush1.msra.mxu0 %v696
      %977 = vmatprep.subr.mxu0 %v699
      %978 = vmatpush1.msra.mxu0 %v698
      %979 = vmatprep.subr.mxu0 %v701
      %980 = vmatpush1.msra.mxu0 %v700
      %981 = vmatprep.subr.mxu0 %v703
      %982 = vmatpush1.msra.mxu0 %v702
      %983 = vmatprep.subr.mxu0 %v705
      %984 = vmatpush1.msra.mxu0 %v704
      %985 = vmatprep.subr.mxu0 %v707
      %986 = vmatpush1.msra.mxu0 %v706
      %987 = vmatprep.subr.mxu0 %v709
      %988 = vmatpush1.msra.mxu0 %v708
      %989 = vmatprep.subr.mxu0 %v711
      %990 = vmatpush1.msra.mxu0 %v710
      %991 = vmatprep.subr.mxu0 %v713
      %992 = vmatpush1.msra.mxu0 %v712
      %993 = vmatprep.subr.mxu0 %v715
      %994 = vmatpush1.msra.mxu0 %v714
      %995 = vmatprep.subr.mxu0 %v717
      %996 = vmatpush1.msra.mxu0 %v716
      %997 = vmatprep.subr.mxu0 %v719
      %998 = vmatpush1.msra.mxu0 %v718
      %999 = vmatprep.subr.mxu0 %v721
      %1000 = vmatpush1.msra.mxu0 %v720
      %1001 = vmatprep.subr.mxu0 %v723
      %1002 = vmatpush1.msra.mxu0 %v722
      %1003 = vmatprep.subr.mxu0 %v725
      %1004 = vmatpush1.msra.mxu0 %v724
      %1005 = vmatprep.subr.mxu0 %v727
      %1006 = vmatpush1.msra.mxu0 %v726
      %1007 = vmatprep.subr.mxu0 %v729
      %1008 = vmatpush1.msra.mxu0 %v728
      %1009 = vmatprep.subr.mxu0 %v731
      %1010 = vmatpush1.msra.mxu0 %v730
      %1011 = vmatprep.subr.mxu0 %v733
      %1012 = vmatpush1.msra.mxu0 %v732
      %1013 = vmatprep.subr.mxu0 %v735
      %1014 = vmatpush1.msra.mxu0 %v734
      %1015 = vmatprep.subr.mxu0 %v737
      %1016 = vmatpush1.msra.mxu0 %v736
      %1017 = vmatprep.subr.mxu0 %v739
      %1018 = vmatpush1.msra.mxu0 %v738
      %1019 = vmatprep.subr.mxu0 %v741
      %1020 = vmatpush1.msra.mxu0 %v740
      %1021 = vmatprep.subr.mxu0 %v743
      %1022 = vmatpush1.msra.mxu0 %v742
      %1023 = vmatprep.subr.mxu0 %v745
      %1024 = vmatpush1.msra.mxu0 %v744
      %1025 = vmatprep.mubr.f32.mxu0 %v473
      %1026 = vmatmul.mubr.f32.gmra.mrb[0].mxu0 %v472
      %v1027 = vpop.f32.mrb[0].mxu0
      %v1028 = vadd.f32 %v957, %v1027
      %v1029 = vpop.f32.mrb[0].mxu0
      %v1030 = vadd.f32 %v959, %v1029
      %1031 = vdwg.mxu0
      %s1032 = scalar_lea.vmem %s164, 2048
      %v1033 = vld [vmem:[%s1032] sm:$0xff]
      %v1034 = vld [vmem:[%s1032 + $0x8] sm:$0xff]
      %v1035 = vld [vmem:[%s1032 + $0x10] sm:$0xff]
      %v1036 = vld [vmem:[%s1032 + $0x18] sm:$0xff]
      %v1037 = vld [vmem:[%s1032 + $0x20] sm:$0xff]
      %v1038 = vld [vmem:[%s1032 + $0x28] sm:$0xff]
      %v1039 = vld [vmem:[%s1032 + $0x30] sm:$0xff]
      %v1040 = vld [vmem:[%s1032 + $0x38] sm:$0xff]
      %v1041 = vld [vmem:[%s1032 + $0x40] sm:$0xff]
      %v1042 = vld [vmem:[%s1032 + $0x48] sm:$0xff]
      %v1043 = vld [vmem:[%s1032 + $0x50] sm:$0xff]
      %v1044 = vld [vmem:[%s1032 + $0x58] sm:$0xff]
      %v1045 = vld [vmem:[%s1032 + $0x60] sm:$0xff]
      %v1046 = vld [vmem:[%s1032 + $0x68] sm:$0xff]
      %v1047 = vld [vmem:[%s1032 + $0x70] sm:$0xff]
      %v1048 = vld [vmem:[%s1032 + $0x78] sm:$0xff]
      %v1049 = vld [vmem:[%s1032 + $0x80] sm:$0xff]
      %v1050 = vld [vmem:[%s1032 + $0x88] sm:$0xff]
      %v1051 = vld [vmem:[%s1032 + $0x90] sm:$0xff]
      %v1052 = vld [vmem:[%s1032 + $0x98] sm:$0xff]
      %v1053 = vld [vmem:[%s1032 + $0xa0] sm:$0xff]
      %v1054 = vld [vmem:[%s1032 + $0xa8] sm:$0xff]
      %v1055 = vld [vmem:[%s1032 + $0xb0] sm:$0xff]
      %v1056 = vld [vmem:[%s1032 + $0xb8] sm:$0xff]
      %v1057 = vld [vmem:[%s1032 + $0xc0] sm:$0xff]
      %v1058 = vld [vmem:[%s1032 + $0xc8] sm:$0xff]
      %v1059 = vld [vmem:[%s1032 + $0xd0] sm:$0xff]
      %v1060 = vld [vmem:[%s1032 + $0xd8] sm:$0xff]
      %v1061 = vld [vmem:[%s1032 + $0xe0] sm:$0xff]
      %v1062 = vld [vmem:[%s1032 + $0xe8] sm:$0xff]
      %v1063 = vld [vmem:[%s1032 + $0xf0] sm:$0xff]
      %v1064 = vld [vmem:[%s1032 + $0xf8] sm:$0xff]
      %v1065 = vld [vmem:[%s1032 + $0x100] sm:$0xff]
      %v1066 = vld [vmem:[%s1032 + $0x108] sm:$0xff]
      %v1067 = vld [vmem:[%s1032 + $0x110] sm:$0xff]
      %v1068 = vld [vmem:[%s1032 + $0x118] sm:$0xff]
      %v1069 = vld [vmem:[%s1032 + $0x120] sm:$0xff]
      %v1070 = vld [vmem:[%s1032 + $0x128] sm:$0xff]
      %v1071 = vld [vmem:[%s1032 + $0x130] sm:$0xff]
      %v1072 = vld [vmem:[%s1032 + $0x138] sm:$0xff]
      %v1073 = vld [vmem:[%s1032 + $0x140] sm:$0xff]
      %v1074 = vld [vmem:[%s1032 + $0x148] sm:$0xff]
      %v1075 = vld [vmem:[%s1032 + $0x150] sm:$0xff]
      %v1076 = vld [vmem:[%s1032 + $0x158] sm:$0xff]
      %v1077 = vld [vmem:[%s1032 + $0x160] sm:$0xff]
      %v1078 = vld [vmem:[%s1032 + $0x168] sm:$0xff]
      %v1079 = vld [vmem:[%s1032 + $0x170] sm:$0xff]
      %v1080 = vld [vmem:[%s1032 + $0x178] sm:$0xff]
      %v1081 = vld [vmem:[%s1032 + $0x180] sm:$0xff]
      %v1082 = vld [vmem:[%s1032 + $0x188] sm:$0xff]
      %v1083 = vld [vmem:[%s1032 + $0x190] sm:$0xff]
      %v1084 = vld [vmem:[%s1032 + $0x198] sm:$0xff]
      %v1085 = vld [vmem:[%s1032 + $0x1a0] sm:$0xff]
      %v1086 = vld [vmem:[%s1032 + $0x1a8] sm:$0xff]
      %v1087 = vld [vmem:[%s1032 + $0x1b0] sm:$0xff]
      %v1088 = vld [vmem:[%s1032 + $0x1b8] sm:$0xff]
      %v1089 = vld [vmem:[%s1032 + $0x1c0] sm:$0xff]
      %v1090 = vld [vmem:[%s1032 + $0x1c8] sm:$0xff]
      %v1091 = vld [vmem:[%s1032 + $0x1d0] sm:$0xff]
      %v1092 = vld [vmem:[%s1032 + $0x1d8] sm:$0xff]
      %v1093 = vld [vmem:[%s1032 + $0x1e0] sm:$0xff]
      %v1094 = vld [vmem:[%s1032 + $0x1e8] sm:$0xff]
      %v1095 = vld [vmem:[%s1032 + $0x1f0] sm:$0xff]
      %v1096 = vld [vmem:[%s1032 + $0x1f8] sm:$0xff]
      %s1097 = scalar_lea.vmem %s164, 2560
      %v1098 = vld [vmem:[%s1097] sm:$0xff]
      %v1099 = vld [vmem:[%s1097 + $0x8] sm:$0xff]
      %v1100 = vld [vmem:[%s1097 + $0x10] sm:$0xff]
      %v1101 = vld [vmem:[%s1097 + $0x18] sm:$0xff]
      %v1102 = vld [vmem:[%s1097 + $0x20] sm:$0xff]
      %v1103 = vld [vmem:[%s1097 + $0x28] sm:$0xff]
      %v1104 = vld [vmem:[%s1097 + $0x30] sm:$0xff]
      %v1105 = vld [vmem:[%s1097 + $0x38] sm:$0xff]
      %v1106 = vld [vmem:[%s1097 + $0x40] sm:$0xff]
      %v1107 = vld [vmem:[%s1097 + $0x48] sm:$0xff]
      %v1108 = vld [vmem:[%s1097 + $0x50] sm:$0xff]
      %v1109 = vld [vmem:[%s1097 + $0x58] sm:$0xff]
      %v1110 = vld [vmem:[%s1097 + $0x60] sm:$0xff]
      %v1111 = vld [vmem:[%s1097 + $0x68] sm:$0xff]
      %v1112 = vld [vmem:[%s1097 + $0x70] sm:$0xff]
      %v1113 = vld [vmem:[%s1097 + $0x78] sm:$0xff]
      %v1114 = vld [vmem:[%s1097 + $0x80] sm:$0xff]
      %v1115 = vld [vmem:[%s1097 + $0x88] sm:$0xff]
      %v1116 = vld [vmem:[%s1097 + $0x90] sm:$0xff]
      %v1117 = vld [vmem:[%s1097 + $0x98] sm:$0xff]
      %v1118 = vld [vmem:[%s1097 + $0xa0] sm:$0xff]
      %v1119 = vld [vmem:[%s1097 + $0xa8] sm:$0xff]
      %v1120 = vld [vmem:[%s1097 + $0xb0] sm:$0xff]
      %v1121 = vld [vmem:[%s1097 + $0xb8] sm:$0xff]
      %v1122 = vld [vmem:[%s1097 + $0xc0] sm:$0xff]
      %v1123 = vld [vmem:[%s1097 + $0xc8] sm:$0xff]
      %v1124 = vld [vmem:[%s1097 + $0xd0] sm:$0xff]
      %v1125 = vld [vmem:[%s1097 + $0xd8] sm:$0xff]
      %v1126 = vld [vmem:[%s1097 + $0xe0] sm:$0xff]
      %v1127 = vld [vmem:[%s1097 + $0xe8] sm:$0xff]
      %v1128 = vld [vmem:[%s1097 + $0xf0] sm:$0xff]
      %v1129 = vld [vmem:[%s1097 + $0xf8] sm:$0xff]
      %v1130 = vld [vmem:[%s1097 + $0x100] sm:$0xff]
      %v1131 = vld [vmem:[%s1097 + $0x108] sm:$0xff]
      %v1132 = vld [vmem:[%s1097 + $0x110] sm:$0xff]
      %v1133 = vld [vmem:[%s1097 + $0x118] sm:$0xff]
      %v1134 = vld [vmem:[%s1097 + $0x120] sm:$0xff]
      %v1135 = vld [vmem:[%s1097 + $0x128] sm:$0xff]
      %v1136 = vld [vmem:[%s1097 + $0x130] sm:$0xff]
      %v1137 = vld [vmem:[%s1097 + $0x138] sm:$0xff]
      %v1138 = vld [vmem:[%s1097 + $0x140] sm:$0xff]
      %v1139 = vld [vmem:[%s1097 + $0x148] sm:$0xff]
      %v1140 = vld [vmem:[%s1097 + $0x150] sm:$0xff]
      %v1141 = vld [vmem:[%s1097 + $0x158] sm:$0xff]
      %v1142 = vld [vmem:[%s1097 + $0x160] sm:$0xff]
      %v1143 = vld [vmem:[%s1097 + $0x168] sm:$0xff]
      %v1144 = vld [vmem:[%s1097 + $0x170] sm:$0xff]
      %v1145 = vld [vmem:[%s1097 + $0x178] sm:$0xff]
      %v1146 = vld [vmem:[%s1097 + $0x180] sm:$0xff]
      %v1147 = vld [vmem:[%s1097 + $0x188] sm:$0xff]
      %v1148 = vld [vmem:[%s1097 + $0x190] sm:$0xff]
      %v1149 = vld [vmem:[%s1097 + $0x198] sm:$0xff]
      %v1150 = vld [vmem:[%s1097 + $0x1a0] sm:$0xff]
      %v1151 = vld [vmem:[%s1097 + $0x1a8] sm:$0xff]
      %v1152 = vld [vmem:[%s1097 + $0x1b0] sm:$0xff]
      %v1153 = vld [vmem:[%s1097 + $0x1b8] sm:$0xff]
      %v1154 = vld [vmem:[%s1097 + $0x1c0] sm:$0xff]
      %v1155 = vld [vmem:[%s1097 + $0x1c8] sm:$0xff]
      %v1156 = vld [vmem:[%s1097 + $0x1d0] sm:$0xff]
      %v1157 = vld [vmem:[%s1097 + $0x1d8] sm:$0xff]
      %v1158 = vld [vmem:[%s1097 + $0x1e0] sm:$0xff]
      %v1159 = vld [vmem:[%s1097 + $0x1e8] sm:$0xff]
      %v1160 = vld [vmem:[%s1097 + $0x1f0] sm:$0xff]
      %v1161 = vld [vmem:[%s1097 + $0x1f8] sm:$0xff]
      %1162 = vmatprep.subr.mxu0 %v1034
      %1163 = vmatpush1.msra.mxu0 %v1033
      %1164 = vmatprep.subr.mxu0 %v1036
      %1165 = vmatpush1.msra.mxu0 %v1035
      %1166 = vmatprep.subr.mxu0 %v1038
      %1167 = vmatpush1.msra.mxu0 %v1037
      %1168 = vmatprep.subr.mxu0 %v1040
      %1169 = vmatpush1.msra.mxu0 %v1039
      %1170 = vmatprep.subr.mxu0 %v1042
      %1171 = vmatpush1.msra.mxu0 %v1041
      %1172 = vmatprep.subr.mxu0 %v1044
      %1173 = vmatpush1.msra.mxu0 %v1043
      %1174 = vmatprep.subr.mxu0 %v1046
      %1175 = vmatpush1.msra.mxu0 %v1045
      %1176 = vmatprep.subr.mxu0 %v1048
      %1177 = vmatpush1.msra.mxu0 %v1047
      %1178 = vmatprep.subr.mxu0 %v1050
      %1179 = vmatpush1.msra.mxu0 %v1049
      %1180 = vmatprep.subr.mxu0 %v1052
      %1181 = vmatpush1.msra.mxu0 %v1051
      %1182 = vmatprep.subr.mxu0 %v1054
      %1183 = vmatpush1.msra.mxu0 %v1053
      %1184 = vmatprep.subr.mxu0 %v1056
      %1185 = vmatpush1.msra.mxu0 %v1055
      %1186 = vmatprep.subr.mxu0 %v1058
      %1187 = vmatpush1.msra.mxu0 %v1057
      %1188 = vmatprep.subr.mxu0 %v1060
      %1189 = vmatpush1.msra.mxu0 %v1059
      %1190 = vmatprep.subr.mxu0 %v1062
      %1191 = vmatpush1.msra.mxu0 %v1061
      %1192 = vmatprep.subr.mxu0 %v1064
      %1193 = vmatpush1.msra.mxu0 %v1063
      %1194 = vmatprep.subr.mxu0 %v1066
      %1195 = vmatpush1.msra.mxu0 %v1065
      %1196 = vmatprep.subr.mxu0 %v1068
      %1197 = vmatpush1.msra.mxu0 %v1067
      %1198 = vmatprep.subr.mxu0 %v1070
      %1199 = vmatpush1.msra.mxu0 %v1069
      %1200 = vmatprep.subr.mxu0 %v1072
      %1201 = vmatpush1.msra.mxu0 %v1071
      %1202 = vmatprep.subr.mxu0 %v1074
      %1203 = vmatpush1.msra.mxu0 %v1073
      %1204 = vmatprep.subr.mxu0 %v1076
      %1205 = vmatpush1.msra.mxu0 %v1075
      %1206 = vmatprep.subr.mxu0 %v1078
      %1207 = vmatpush1.msra.mxu0 %v1077
      %1208 = vmatprep.subr.mxu0 %v1080
      %1209 = vmatpush1.msra.mxu0 %v1079
      %1210 = vmatprep.subr.mxu0 %v1082
      %1211 = vmatpush1.msra.mxu0 %v1081
      %1212 = vmatprep.subr.mxu0 %v1084
      %1213 = vmatpush1.msra.mxu0 %v1083
      %1214 = vmatprep.subr.mxu0 %v1086
      %1215 = vmatpush1.msra.mxu0 %v1085
      %1216 = vmatprep.subr.mxu0 %v1088
      %1217 = vmatpush1.msra.mxu0 %v1087
      %1218 = vmatprep.subr.mxu0 %v1090
      %1219 = vmatpush1.msra.mxu0 %v1089
      %1220 = vmatprep.subr.mxu0 %v1092
      %1221 = vmatpush1.msra.mxu0 %v1091
      %1222 = vmatprep.subr.mxu0 %v1094
      %1223 = vmatpush1.msra.mxu0 %v1093
      %1224 = vmatprep.subr.mxu0 %v1096
      %1225 = vmatpush1.msra.mxu0 %v1095
      %1226 = vmatprep.mubr.f32.mxu0 %v889
      %1227 = vmatmul.mubr.f32.gmra.mrb[0].mxu0 %v888
      %v1228 = vpop.f32.mrb[0].mxu0
      %v1229 = vadd.f32 0.0, %v1228
      %v1230 = vpop.f32.mrb[0].mxu0
      %v1231 = vadd.f32 0.0, %v1230
      %1232 = vdwg.mxu0
      %1233 = vmatprep.subr.mxu0 %v1099
      %1234 = vmatpush1.msra.mxu0 %v1098
      %1235 = vmatprep.subr.mxu0 %v1101
      %1236 = vmatpush1.msra.mxu0 %v1100
      %1237 = vmatprep.subr.mxu0 %v1103
      %1238 = vmatpush1.msra.mxu0 %v1102
      %1239 = vmatprep.subr.mxu0 %v1105
      %1240 = vmatpush1.msra.mxu0 %v1104
      %1241 = vmatprep.subr.mxu0 %v1107
      %1242 = vmatpush1.msra.mxu0 %v1106
      %1243 = vmatprep.subr.mxu0 %v1109
      %1244 = vmatpush1.msra.mxu0 %v1108
      %1245 = vmatprep.subr.mxu0 %v1111
      %1246 = vmatpush1.msra.mxu0 %v1110
      %1247 = vmatprep.subr.mxu0 %v1113
      %1248 = vmatpush1.msra.mxu0 %v1112
      %1249 = vmatprep.subr.mxu0 %v1115
      %1250 = vmatpush1.msra.mxu0 %v1114
      %1251 = vmatprep.subr.mxu0 %v1117
      %1252 = vmatpush1.msra.mxu0 %v1116
      %1253 = vmatprep.subr.mxu0 %v1119
      %1254 = vmatpush1.msra.mxu0 %v1118
      %1255 = vmatprep.subr.mxu0 %v1121
      %1256 = vmatpush1.msra.mxu0 %v1120
      %1257 = vmatprep.subr.mxu0 %v1123
      %1258 = vmatpush1.msra.mxu0 %v1122
      %1259 = vmatprep.subr.mxu0 %v1125
      %1260 = vmatpush1.msra.mxu0 %v1124
      %1261 = vmatprep.subr.mxu0 %v1127
      %1262 = vmatpush1.msra.mxu0 %v1126
      %1263 = vmatprep.subr.mxu0 %v1129
      %1264 = vmatpush1.msra.mxu0 %v1128
      %1265 = vmatprep.subr.mxu0 %v1131
      %1266 = vmatpush1.msra.mxu0 %v1130
      %1267 = vmatprep.subr.mxu0 %v1133
      %1268 = vmatpush1.msra.mxu0 %v1132
      %1269 = vmatprep.subr.mxu0 %v1135
      %1270 = vmatpush1.msra.mxu0 %v1134
      %1271 = vmatprep.subr.mxu0 %v1137
      %1272 = vmatpush1.msra.mxu0 %v1136
      %1273 = vmatprep.subr.mxu0 %v1139
      %1274 = vmatpush1.msra.mxu0 %v1138
      %1275 = vmatprep.subr.mxu0 %v1141
      %1276 = vmatpush1.msra.mxu0 %v1140
      %1277 = vmatprep.subr.mxu0 %v1143
      %1278 = vmatpush1.msra.mxu0 %v1142
      %1279 = vmatprep.subr.mxu0 %v1145
      %1280 = vmatpush1.msra.mxu0 %v1144
      %1281 = vmatprep.subr.mxu0 %v1147
      %1282 = vmatpush1.msra.mxu0 %v1146
      %1283 = vmatprep.subr.mxu0 %v1149
      %1284 = vmatpush1.msra.mxu0 %v1148
      %1285 = vmatprep.subr.mxu0 %v1151
      %1286 = vmatpush1.msra.mxu0 %v1150
      %1287 = vmatprep.subr.mxu0 %v1153
      %1288 = vmatpush1.msra.mxu0 %v1152
      %1289 = vmatprep.subr.mxu0 %v1155
      %1290 = vmatpush1.msra.mxu0 %v1154
      %1291 = vmatprep.subr.mxu0 %v1157
      %1292 = vmatpush1.msra.mxu0 %v1156
      %1293 = vmatprep.subr.mxu0 %v1159
      %1294 = vmatpush1.msra.mxu0 %v1158
      %1295 = vmatprep.subr.mxu0 %v1161
      %1296 = vmatpush1.msra.mxu0 %v1160
      %1297 = vmatprep.mubr.f32.mxu0 %v1030
      %1298 = vmatmul.mubr.f32.gmra.mrb[0].mxu0 %v1028
      %v1299 = vpop.f32.mrb[0].mxu0
      %v1300 = vadd.f32 0.0, %v1299
      %v1301 = vpop.f32.mrb[0].mxu0
      %v1302 = vadd.f32 0.0, %v1301
      %1303 = vdwg.mxu0
      %v1304 = vsub.f32 %v1229, %v1300
      %v1305 = vsub.f32 %v1231, %v1302
      %1306 = vmatprep.subr.mxu0 %v1034
      %1307 = vmatpush1.msra.mxu0 %v1033
      %1308 = vmatprep.subr.mxu0 %v1036
      %1309 = vmatpush1.msra.mxu0 %v1035
      %1310 = vmatprep.subr.mxu0 %v1038
      %1311 = vmatpush1.msra.mxu0 %v1037
      %1312 = vmatprep.subr.mxu0 %v1040
      %1313 = vmatpush1.msra.mxu0 %v1039
      %1314 = vmatprep.subr.mxu0 %v1042
      %1315 = vmatpush1.msra.mxu0 %v1041
      %1316 = vmatprep.subr.mxu0 %v1044
      %1317 = vmatpush1.msra.mxu0 %v1043
      %1318 = vmatprep.subr.mxu0 %v1046
      %1319 = vmatpush1.msra.mxu0 %v1045
      %1320 = vmatprep.subr.mxu0 %v1048
      %1321 = vmatpush1.msra.mxu0 %v1047
      %1322 = vmatprep.subr.mxu0 %v1050
      %1323 = vmatpush1.msra.mxu0 %v1049
      %1324 = vmatprep.subr.mxu0 %v1052
      %1325 = vmatpush1.msra.mxu0 %v1051
      %1326 = vmatprep.subr.mxu0 %v1054
      %1327 = vmatpush1.msra.mxu0 %v1053
      %1328 = vmatprep.subr.mxu0 %v1056
      %1329 = vmatpush1.msra.mxu0 %v1055
      %1330 = vmatprep.subr.mxu0 %v1058
      %1331 = vmatpush1.msra.mxu0 %v1057
      %1332 = vmatprep.subr.mxu0 %v1060
      %1333 = vmatpush1.msra.mxu0 %v1059
      %1334 = vmatprep.subr.mxu0 %v1062
      %1335 = vmatpush1.msra.mxu0 %v1061
      %1336 = vmatprep.subr.mxu0 %v1064
      %1337 = vmatpush1.msra.mxu0 %v1063
      %1338 = vmatprep.subr.mxu0 %v1066
      %1339 = vmatpush1.msra.mxu0 %v1065
      %1340 = vmatprep.subr.mxu0 %v1068
      %1341 = vmatpush1.msra.mxu0 %v1067
      %1342 = vmatprep.subr.mxu0 %v1070
      %1343 = vmatpush1.msra.mxu0 %v1069
      %1344 = vmatprep.subr.mxu0 %v1072
      %1345 = vmatpush1.msra.mxu0 %v1071
      %1346 = vmatprep.subr.mxu0 %v1074
      %1347 = vmatpush1.msra.mxu0 %v1073
      %1348 = vmatprep.subr.mxu0 %v1076
      %1349 = vmatpush1.msra.mxu0 %v1075
      %1350 = vmatprep.subr.mxu0 %v1078
      %1351 = vmatpush1.msra.mxu0 %v1077
      %1352 = vmatprep.subr.mxu0 %v1080
      %1353 = vmatpush1.msra.mxu0 %v1079
      %1354 = vmatprep.subr.mxu0 %v1082
      %1355 = vmatpush1.msra.mxu0 %v1081
      %1356 = vmatprep.subr.mxu0 %v1084
      %1357 = vmatpush1.msra.mxu0 %v1083
      %1358 = vmatprep.subr.mxu0 %v1086
      %1359 = vmatpush1.msra.mxu0 %v1085
      %1360 = vmatprep.subr.mxu0 %v1088
      %1361 = vmatpush1.msra.mxu0 %v1087
      %1362 = vmatprep.subr.mxu0 %v1090
      %1363 = vmatpush1.msra.mxu0 %v1089
      %1364 = vmatprep.subr.mxu0 %v1092
      %1365 = vmatpush1.msra.mxu0 %v1091
      %1366 = vmatprep.subr.mxu0 %v1094
      %1367 = vmatpush1.msra.mxu0 %v1093
      %1368 = vmatprep.subr.mxu0 %v1096
      %1369 = vmatpush1.msra.mxu0 %v1095
      %1370 = vmatprep.mubr.f32.mxu0 %v1030
      %1371 = vmatmul.mubr.f32.gmra.mrb[0].mxu0 %v1028
      %v1372 = vpop.f32.mrb[0].mxu0
      %v1373 = vadd.f32 0.0, %v1372
      %v1374 = vpop.f32.mrb[0].mxu0
      %v1375 = vadd.f32 0.0, %v1374
      %1376 = vdwg.mxu0
      %1377 = vmatprep.subr.mxu0 %v1099
      %1378 = vmatpush1.msra.mxu0 %v1098
      %1379 = vmatprep.subr.mxu0 %v1101
      %1380 = vmatpush1.msra.mxu0 %v1100
      %1381 = vmatprep.subr.mxu0 %v1103
      %1382 = vmatpush1.msra.mxu0 %v1102
      %1383 = vmatprep.subr.mxu0 %v1105
      %1384 = vmatpush1.msra.mxu0 %v1104
      %1385 = vmatprep.subr.mxu0 %v1107
      %1386 = vmatpush1.msra.mxu0 %v1106
      %1387 = vmatprep.subr.mxu0 %v1109
      %1388 = vmatpush1.msra.mxu0 %v1108
      %1389 = vmatprep.subr.mxu0 %v1111
      %1390 = vmatpush1.msra.mxu0 %v1110
      %1391 = vmatprep.subr.mxu0 %v1113
      %1392 = vmatpush1.msra.mxu0 %v1112
      %1393 = vmatprep.subr.mxu0 %v1115
      %1394 = vmatpush1.msra.mxu0 %v1114
      %1395 = vmatprep.subr.mxu0 %v1117
      %1396 = vmatpush1.msra.mxu0 %v1116
      %1397 = vmatprep.subr.mxu0 %v1119
      %1398 = vmatpush1.msra.mxu0 %v1118
      %1399 = vmatprep.subr.mxu0 %v1121
      %1400 = vmatpush1.msra.mxu0 %v1120
      %1401 = vmatprep.subr.mxu0 %v1123
      %1402 = vmatpush1.msra.mxu0 %v1122
      %1403 = vmatprep.subr.mxu0 %v1125
      %1404 = vmatpush1.msra.mxu0 %v1124
      %1405 = vmatprep.subr.mxu0 %v1127
      %1406 = vmatpush1.msra.mxu0 %v1126
      %1407 = vmatprep.subr.mxu0 %v1129
      %1408 = vmatpush1.msra.mxu0 %v1128
      %1409 = vmatprep.subr.mxu0 %v1131
      %1410 = vmatpush1.msra.mxu0 %v1130
      %1411 = vmatprep.subr.mxu0 %v1133
      %1412 = vmatpush1.msra.mxu0 %v1132
      %1413 = vmatprep.subr.mxu0 %v1135
      %1414 = vmatpush1.msra.mxu0 %v1134
      %1415 = vmatprep.subr.mxu0 %v1137
      %1416 = vmatpush1.msra.mxu0 %v1136
      %1417 = vmatprep.subr.mxu0 %v1139
      %1418 = vmatpush1.msra.mxu0 %v1138
      %1419 = vmatprep.subr.mxu0 %v1141
      %1420 = vmatpush1.msra.mxu0 %v1140
      %1421 = vmatprep.subr.mxu0 %v1143
      %1422 = vmatpush1.msra.mxu0 %v1142
      %1423 = vmatprep.subr.mxu0 %v1145
      %1424 = vmatpush1.msra.mxu0 %v1144
      %1425 = vmatprep.subr.mxu0 %v1147
      %1426 = vmatpush1.msra.mxu0 %v1146
      %1427 = vmatprep.subr.mxu0 %v1149
      %1428 = vmatpush1.msra.mxu0 %v1148
      %1429 = vmatprep.subr.mxu0 %v1151
      %1430 = vmatpush1.msra.mxu0 %v1150
      %1431 = vmatprep.subr.mxu0 %v1153
      %1432 = vmatpush1.msra.mxu0 %v1152
      %1433 = vmatprep.subr.mxu0 %v1155
      %1434 = vmatpush1.msra.mxu0 %v1154
      %1435 = vmatprep.subr.mxu0 %v1157
      %1436 = vmatpush1.msra.mxu0 %v1156
      %1437 = vmatprep.subr.mxu0 %v1159
      %1438 = vmatpush1.msra.mxu0 %v1158
      %1439 = vmatprep.subr.mxu0 %v1161
      %1440 = vmatpush1.msra.mxu0 %v1160
      %1441 = vmatprep.mubr.f32.mxu0 %v889
      %1442 = vmatmul.mubr.f32.gmra.mrb[0].mxu0 %v888
      %v1443 = vpop.f32.mrb[0].mxu0
      %v1444 = vadd.f32 %v1373, %v1443
      %v1445 = vpop.f32.mrb[0].mxu0
      %v1446 = vadd.f32 %v1375, %v1445
      %1447 = vdwg.mxu0
      %v1448 = vmul.f32 %v1304, %v1304
      %v1449 = vmul.f32 %v1305, %v1305
      %v1450 = vmul.f32 %v1444, %v1444
      %v1451 = vmul.f32 %v1446, %v1446
      %v1452 = vadd.f32 %v1448, %v1450
      %v1453 = vadd.f32 %v1449, %v1451
      %v1454 = vld [vmem:[%s2] sm:$0xf]
      %v1455 = vlaneseq
      %v1456 = vshrl.u32 %v1455, 7
      %v1457 = vsub.s32 0, %v1456
      %v1458 = vrot.slane %v1452, %v1457
      %v1459 = vlaneseq
      %v1460 = vshrl.u32 %v1459, 7
      %v1461 = vsub.s32 0, %v1460
      %v1462 = vrot.slane %v1453, %v1461
      %v1465 = vunpack.c.l.s4 1983009808
      %v1466 = vunpack.c.0.s8 %v1465
      %v1467 = vlaneseq
      %v1468 = vshrl.u32 %v1467, 7
      %v1469 = vsub.s32 %v1466, %v1468
      %v1470 = vrot.slane %v1454, %v1469
      %v1471 = vcombine.high %v1470, %v1470
      %v1474 = vmul.f32 %v1458, %v1470
      %v1475 = vmul.f32 %v1462, %v1471
      %vm1476 = vcmask 1041408
      %v1477 = vsel %vm1476, %v1474, 0.0
      %v1478 = vsel %vm1476, %v1475, 0.0
      %v1479 = vadd.f32 %v1477, %v1478
      %1480 = vadd.xlane.f32.xlu0 %v1479
      %v1481 = vpop.xlane.xlu0 %1480
      %1482 = vst [vmem:[%s168] sm:$0x3] %v1481
      %p1483 = scmp.lt.s32.totalorder %s14, 2
      %s1484 = scalar_select %p1483, %s14, 2
      %s1485 = smul.addr %s1484, 2
      %s1486 = scalar_lea.vmem %s3, %s1485
      // Predicated region
      $region33: #{qcnn_forward.1} parent=31 // pred_check
        %p1487 = pneg %p100
      $region34: #{qcnn_forward.1} parent=31 // pred_check_branch
        %1489 = sbr.rel (%p1487) target = $region36
      $region35: #{qcnn_forward.1} parent=31 // pred_region
        _
      $region36: #{qcnn_forward.1} parent=31 // pred_fallthru
        _
    $region32: #{qcnn_forward.1} parent=5 // pred_fallthru
      _
    %p1490 = scmp.le.s32.totalorder 2, %s9
    // Predicated region
    $region37: #{qcnn_forward.1} parent=5 // pred_check
      %p1491 = pneg %p1490
    $region38: #{qcnn_forward.1} parent=5 // pred_check_branch
      %1493 = sbr.rel (%p1491) target = $region40
    $region39: #{qcnn_forward.1} parent=5 // pred_region
      %s1494 = ssub.s32 %s9, 2
      // Predicated region
      $region41: #{qcnn_forward.1} parent=39 // pred_check
        %p1495 = pneg %p106
      $region42: #{qcnn_forward.1} parent=39 // pred_check_branch
        %1497 = sbr.rel (%p1495) target = $region44
      $region43: #{qcnn_forward.1} parent=39 // pred_region
        %p1498 = scmp.lt.s32.totalorder %s15, 2
        %s1499 = scalar_select %p1498, %s15, 2
        %s1500 = smul.addr %s1499, 2
        %s1501 = scalar_lea.vmem %s3, %s1500
      $region44: #{qcnn_forward.1} parent=39 // pred_fallthru
        _
    $region40: #{qcnn_forward.1} parent=5 // pred_fallthru
      _
  $region6: #{qcnn_forward.1} parent=0 // loop_footer
    %s13 = sadd.s32 1, %s9
  $region7: #{qcnn_forward.1} parent=0 // loop_footer_branch
    %8 = sbr.rel target = $region3
  $region8: #{qcnn_forward.1} parent=0 // loop_exit
    _

</llo_original>
